<compile_context>
chip_gen: v6e
topology: v6e:2x2x1
jax: 0.10.0
libtpu: 0.0.40
codegen_flags: <defaults>
</compile_context>

<pallas_src>
import jax
import jax.numpy as jnp
from jax import lax
from jax.experimental import pallas as pl
from jax.experimental.pallas import tpu as pltpu

# ---- model hyperparameters (from the PyTorch script) -----------------------
SEQ = 8            # sequence length (small example)
BATCH = 2          # batch size for the example (module default was 1)
NUM_FEATURES = 16  # `num_features` is undefined in the original script; pick 16
HIDDEN = 10        # hidden_size
H2 = 10            # h2_size


def _net_kernel(
    # inputs
    x_ref, h0_ref, gates_ref, head_ref,
    # outputs
    y_ref, h_final_ref,
    # scratch
    gi_scr, h_all_scr,
):
    F_, H = NUM_FEATURES, HIDDEN

    # ---- hoisted weight loads (static slices of the packed slabs) ----------
    w_ih   = gates_ref[0:F_, :]                               # (F, 3H)
    w_hh   = gates_ref[F_:F_ + H, :]                          # (H, 3H)
    b_comb = gates_ref[F_ + H:F_ + H + 1, :]                  # (1, 3H) = [bir+bhr, biz+bhz, bin]
    b_hn   = gates_ref[F_ + H + 1:F_ + H + 2, 2 * H:3 * H]    # (1, H)

    # ---- input projections for ALL timesteps in one MXU push ---------------
    x_flat = x_ref[...].reshape(SEQ * BATCH, F_)
    gi_scr[...] = (
        jnp.dot(x_flat, w_ih, preferred_element_type=jnp.float32) + b_comb
    ).reshape(SEQ, BATCH, 3 * H)

    # ---- GRU recurrence (PyTorch gate order r, z, n), fully unrolled -------
    def step(t, h):
        gi = gi_scr[t]                                               # (B, 3H)
        gh = jnp.dot(h, w_hh, preferred_element_type=jnp.float32)    # (B, 3H)
        r = jax.nn.sigmoid(gi[:, 0:H] + gh[:, 0:H])
        z = jax.nn.sigmoid(gi[:, H:2 * H] + gh[:, H:2 * H])
        n = jnp.tanh(gi[:, 2 * H:3 * H] + r * (gh[:, 2 * H:3 * H] + b_hn))
        h_new = (1.0 - z) * n + z * h
        h_all_scr[t] = h_new
        return h_new

    h_last = lax.fori_loop(0, SEQ, step, h0_ref[0], unroll=True)

    # ---- MLP head over all timesteps at once: y = W2(relu(W1(h))) ----------
    w1 = head_ref[0:H, :]                 # (H, H2)
    b1 = head_ref[H:H + 1, :]             # (1, H2)
    w2 = head_ref[H + 1:H + 2, :]         # (1, H2)  (W2 weight as a row)
    b2 = head_ref[H + 2:H + 3, 0:1]       # (1, 1)

    h1 = h_all_scr[...].reshape(SEQ * BATCH, H)
    h2 = jnp.maximum(jnp.dot(h1, w1, preferred_element_type=jnp.float32) + b1, 0.0)
    y = jnp.sum(h2 * w2, axis=-1, keepdims=True) + b2                 # (SEQ*BATCH, 1)

    y_ref[...] = y
    h_final_ref[0] = h_last


def _pack_params(p):
    """Pack the 16 GRU/MLP tensors into two VMEM-friendly slabs."""
    w_ih = jnp.concatenate([p["w_ir"], p["w_iz"], p["w_in"]], axis=1)        # (F, 3H)
    w_hh = jnp.concatenate([p["w_hr"], p["w_hz"], p["w_hn"]], axis=1)        # (H, 3H)
    # r/z biases can be pre-summed; b_in stays outside r*(...), b_hn inside.
    b_comb = jnp.concatenate(
        [p["b_ir"] + p["b_hr"], p["b_iz"] + p["b_hz"], p["b_in"]], axis=1)   # (1, 3H)
    b_h = jnp.concatenate([p["b_hr"], p["b_hz"], p["b_hn"]], axis=1)         # (1, 3H)
    gates = jnp.concatenate([w_ih, w_hh, b_comb, b_h], axis=0)               # (F+H+2, 3H)

    head = jnp.concatenate(
        [p["w1"],                              # (H, H2)
         p["b1"],                              # (1, H2)
         p["w2"].T,                            # (1, H2)
         jnp.broadcast_to(p["b2"], (1, H2))],  # (1, H2) (only col 0 used)
        axis=0)                                                              # (H+3, H2)
    return gates, head


def net_forward(x, hidden, params):
    """x: (SEQ, BATCH, NUM_FEATURES); hidden: (1, BATCH, HIDDEN).
    Returns (y, hidden) with y: (SEQ*BATCH, 1), hidden: (1, BATCH, HIDDEN)."""
    seq, batch, feat = x.shape
    gates, head = _pack_params(params)

    y, h_final = pl.pallas_call(
        _net_kernel,
        out_shape=(
            jax.ShapeDtypeStruct((seq * batch, 1), jnp.float32),     # y (single slab)
            jax.ShapeDtypeStruct((1, batch, HIDDEN), jnp.float32),   # final hidden
        ),
        grid_spec=pltpu.PrefetchScalarGridSpec(
            num_scalar_prefetch=0,
            grid=(1,),
            in_specs=[
                pl.BlockSpec((seq, batch, feat), lambda i: (0, 0, 0)),     # x
                pl.BlockSpec((1, batch, HIDDEN), lambda i: (0, 0, 0)),     # h0
                pl.BlockSpec(gates.shape, lambda i: (0, 0)),               # packed gates
                pl.BlockSpec(head.shape, lambda i: (0, 0)),                # packed head
            ],
            out_specs=(
                pl.BlockSpec((seq * batch, 1), lambda i: (0, 0)),
                pl.BlockSpec((1, batch, HIDDEN), lambda i: (0, 0, 0)),
            ),
            scratch_shapes=[
                pltpu.VMEM((seq, batch, 3 * HIDDEN), jnp.float32),  # precomputed x-projections
                pltpu.VMEM((seq, batch, HIDDEN), jnp.float32),      # hidden states (for MLP head)
            ],
        ),
        compiler_params=pltpu.CompilerParams(
            dimension_semantics=("arbitrary",),  # recurrence: single sequential step
        ),
    )(x, hidden, gates, head)

    return y, h_final


def init_params(key):
    """Deterministic init mirroring PyTorch shapes (weights stored pre-transposed
    so the kernel does row-major x @ W)."""
    ks = jax.random.split(key, 20)
    s = 1.0 / jnp.sqrt(HIDDEN)
    u = lambda k, shape: jax.random.uniform(k, shape, jnp.float32, -s, s)
    p = {
        # GRU input->hidden weights, (NUM_FEATURES, HIDDEN) each (transposed W_ih rows)
        "w_ir": u(ks[0], (NUM_FEATURES, HIDDEN)),
        "w_iz": u(ks[1], (NUM_FEATURES, HIDDEN)),
        "w_in": u(ks[2], (NUM_FEATURES, HIDDEN)),
        # GRU hidden->hidden weights, (HIDDEN, HIDDEN)
        "w_hr": u(ks[3], (HIDDEN, HIDDEN)),
        "w_hz": u(ks[4], (HIDDEN, HIDDEN)),
        "w_hn": u(ks[5], (HIDDEN, HIDDEN)),
        # GRU biases, kept 2D (1, HIDDEN) for TPU-friendly layout
        "b_ir": u(ks[6], (1, HIDDEN)), "b_iz": u(ks[7], (1, HIDDEN)), "b_in": u(ks[8], (1, HIDDEN)),
        "b_hr": u(ks[9], (1, HIDDEN)), "b_hz": u(ks[10], (1, HIDDEN)), "b_hn": u(ks[11], (1, HIDDEN)),
        # W1: Linear(HIDDEN, H2), stored transposed (HIDDEN, H2)
        "w1": u(ks[12], (HIDDEN, H2)),
        "b1": u(ks[13], (1, H2)),
        # W2: Linear(H2, 1), stored transposed (H2, 1)
        "w2": u(ks[14], (H2, 1)),
        "b2": u(ks[15], (1, 1)),
    }
    return p


def net_forward_ref(x, hidden, p):
    """Pure-JAX reference (same math as torch.nn.GRU + Linear layers)."""
    h0 = hidden[0]

    def step(h, xt):
        r = jax.nn.sigmoid(xt @ p["w_ir"] + p["b_ir"] + h @ p["w_hr"] + p["b_hr"])
        z = jax.nn.sigmoid(xt @ p["w_iz"] + p["b_iz"] + h @ p["w_hz"] + p["b_hz"])
        n = jnp.tanh(xt @ p["w_in"] + p["b_in"] + r * (h @ p["w_hn"] + p["b_hn"]))
        h_new = (1.0 - z) * n + z * h
        return h_new, h_new

    h_final, outs = jax.lax.scan(step, h0, x)
    h1 = outs.reshape(-1, HIDDEN)
    h2 = jnp.maximum(h1 @ p["w1"] + p["b1"], 0.0)
    y = h2 @ p["w2"] + p["b2"]
    return y, h_final.reshape(1, *h_final.shape)


if __name__ == "__main__":
    key = jax.random.PRNGKey(0)
    k_x, k_p = jax.random.split(key)
    x = jax.random.normal(k_x, (SEQ, BATCH, NUM_FEATURES), jnp.float32)
    hidden0 = jnp.zeros((1, BATCH, HIDDEN), jnp.float32)  # init_hidden()
    params = init_params(k_p)

    y, h_final = net_forward(x, hidden0, params)
    y = jax.block_until_ready(y)
    h_final = jax.block_until_ready(h_final)

    y_ref, h_ref = net_forward_ref(x, hidden0, params)
    assert y.shape == (SEQ * BATCH, 1) and h_final.shape == (1, BATCH, HIDDEN)
    assert jnp.allclose(y, y_ref, atol=1e-5, rtol=1e-5)
    assert jnp.allclose(h_final, h_ref, atol=1e-5, rtol=1e-5)

    print("KERNEL_OK")
</pallas_src>

<mosaic_0001>
module attributes {stable_mosaic.version = 11 : i64} {
  func.func @_net_kernel(%arg0: i32, %arg1: memref<8x2x16xf32, #tpu.memory_space<vmem>>, %arg2: memref<1x2x10xf32, #tpu.memory_space<vmem>>, %arg3: memref<28x30xf32, #tpu.memory_space<vmem>>, %arg4: memref<13x10xf32, #tpu.memory_space<vmem>>, %arg5: memref<16x1xf32, #tpu.memory_space<vmem>>, %arg6: memref<1x2x10xf32, #tpu.memory_space<vmem>>, %arg7: memref<8x2x30xf32, #tpu.memory_space<vmem>>, %arg8: memref<8x2x10xf32, #tpu.memory_space<vmem>>) attributes {dimension_semantics = [#tpu.dimension_semantics<arbitrary>], iteration_bounds = array<i64: 1>, scalar_prefetch = 0 : i64, scratch_operands = 2 : i64, tpu.core_type = #tpu.core_type<tc>, window_params = [{pipeline_mode = #tpu.pipeline_mode<synchronous>, transform_indices = @transform_0, window_bounds = array<i64: 8, 2, 16>}, {pipeline_mode = #tpu.pipeline_mode<synchronous>, transform_indices = @transform_1, window_bounds = array<i64: 1, 2, 10>}, {pipeline_mode = #tpu.pipeline_mode<synchronous>, transform_indices = @transform_2, window_bounds = array<i64: 28, 30>}, {pipeline_mode = #tpu.pipeline_mode<synchronous>, transform_indices = @transform_3, window_bounds = array<i64: 13, 10>}, {pipeline_mode = #tpu.pipeline_mode<synchronous>, transform_indices = @transform_4, window_bounds = array<i64: 16, 1>}, {pipeline_mode = #tpu.pipeline_mode<synchronous>, transform_indices = @transform_5, window_bounds = array<i64: 1, 2, 10>}]} {
    %c0 = arith.constant 0 : index
    %c0_0 = arith.constant 0 : index
    %0 = vector.load %arg3[%c0, %c0_0] : memref<28x30xf32, #tpu.memory_space<vmem>>, vector<16x30xf32>
    %c16 = arith.constant 16 : index
    %c0_1 = arith.constant 0 : index
    %1 = vector.load %arg3[%c16, %c0_1] : memref<28x30xf32, #tpu.memory_space<vmem>>, vector<10x30xf32>
    %c26 = arith.constant 26 : index
    %c0_2 = arith.constant 0 : index
    %2 = vector.load %arg3[%c26, %c0_2] : memref<28x30xf32, #tpu.memory_space<vmem>>, vector<1x30xf32>
    %c27 = arith.constant 27 : index
    %c20 = arith.constant 20 : index
    %3 = vector.load %arg3[%c27, %c20] : memref<28x30xf32, #tpu.memory_space<vmem>>, vector<1x10xf32>
    %c0_3 = arith.constant 0 : index
    %c0_4 = arith.constant 0 : index
    %c0_5 = arith.constant 0 : index
    %4 = vector.load %arg1[%c0_3, %c0_4, %c0_5] : memref<8x2x16xf32, #tpu.memory_space<vmem>>, vector<8x2x16xf32>
    %5 = vector.shape_cast %4 : vector<8x2x16xf32> to vector<16x16xf32>
    %cst = arith.constant dense<0.000000e+00> : vector<16x30xf32>
    %6 = tpu.matmul %5, %0, %cst {dimension_numbers = #tpu.dot_dimension_numbers<[1], [0], [0], [1], [0, 0, 1, 1], [], []>} : vector<16x16xf32>, vector<16x30xf32>, vector<16x30xf32> -> vector<16x30xf32>
    %7 = vector.broadcast %2 : vector<1x30xf32> to vector<16x30xf32>
    %8 = arith.addf %6, %7 : vector<16x30xf32>
    %9 = vector.shape_cast %8 : vector<16x30xf32> to vector<8x2x30xf32>
    %c0_6 = arith.constant 0 : index
    %c0_7 = arith.constant 0 : index
    %c0_8 = arith.constant 0 : index
    %10 = vector.load %arg7[%c0_6, %c0_7, %c0_8] : memref<8x2x30xf32, #tpu.memory_space<vmem>>, vector<8x2x30xf32>
    tpu.vector_store %arg7[%c0_6, %c0_7, %c0_8], %9 {strides = array<i32>} : memref<8x2x30xf32, #tpu.memory_space<vmem>>, vector<8x2x30xf32>,
    %c0_9 = arith.constant 0 : index
    %c0_10 = arith.constant 0 : index
    %c0_11 = arith.constant 0 : index
    %11 = vector.load %arg2[%c0_9, %c0_10, %c0_11] : memref<1x2x10xf32, #tpu.memory_space<vmem>>, vector<1x2x10xf32>
    %12 = vector.shape_cast %11 : vector<1x2x10xf32> to vector<2x10xf32>
    %c0_i32 = arith.constant 0 : i32
    %13 = arith.index_cast %c0_i32 : i32 to index
    %c0_12 = arith.constant 0 : index
    %c0_13 = arith.constant 0 : index
    %14 = vector.load %arg7[%13, %c0_12, %c0_13] : memref<8x2x30xf32, #tpu.memory_space<vmem>>, vector<1x2x30xf32>
    %15 = vector.shape_cast %14 : vector<1x2x30xf32> to vector<2x30xf32>
    %cst_14 = arith.constant dense<0.000000e+00> : vector<2x30xf32>
    %16 = tpu.matmul %12, %1, %cst_14 {dimension_numbers = #tpu.dot_dimension_numbers<[1], [0], [0], [1], [0, 0, 1, 1], [], []>} : vector<2x10xf32>, vector<10x30xf32>, vector<2x30xf32> -> vector<2x30xf32>
    %17 = vector.extract_strided_slice %15 {offsets = [0, 0], sizes = [2, 10], strides = [1, 1]} : vector<2x30xf32> to vector<2x10xf32>
    %18 = vector.extract_strided_slice %16 {offsets = [0, 0], sizes = [2, 10], strides = [1, 1]} : vector<2x30xf32> to vector<2x10xf32>
    %19 = arith.addf %17, %18 : vector<2x10xf32>
    %20 = arith.negf %19 : vector<2x10xf32>
    %21 = math.exp %20 : vector<2x10xf32>
    %cst_15 = arith.constant 1.000000e+00 : f32
    %22 = vector.broadcast %cst_15 : f32 to vector<2x10xf32>
    %23 = arith.addf %22, %21 : vector<2x10xf32>
    %24 = arith.divf %22, %23 : vector<2x10xf32>
    %25 = vector.extract_strided_slice %15 {offsets = [0, 10], sizes = [2, 10], strides = [1, 1]} : vector<2x30xf32> to vector<2x10xf32>
    %26 = vector.extract_strided_slice %16 {offsets = [0, 10], sizes = [2, 10], strides = [1, 1]} : vector<2x30xf32> to vector<2x10xf32>
    %27 = arith.addf %25, %26 : vector<2x10xf32>
    %28 = arith.negf %27 : vector<2x10xf32>
    %29 = math.exp %28 : vector<2x10xf32>
    %cst_16 = arith.constant 1.000000e+00 : f32
    %30 = vector.broadcast %cst_16 : f32 to vector<2x10xf32>
    %31 = arith.addf %30, %29 : vector<2x10xf32>
    %32 = arith.divf %30, %31 : vector<2x10xf32>
    %33 = vector.extract_strided_slice %15 {offsets = [0, 20], sizes = [2, 10], strides = [1, 1]} : vector<2x30xf32> to vector<2x10xf32>
    %34 = vector.extract_strided_slice %16 {offsets = [0, 20], sizes = [2, 10], strides = [1, 1]} : vector<2x30xf32> to vector<2x10xf32>
    %35 = vector.broadcast %3 : vector<1x10xf32> to vector<2x10xf32>
    %36 = arith.addf %34, %35 : vector<2x10xf32>
    %37 = arith.mulf %24, %36 : vector<2x10xf32>
    %38 = arith.addf %33, %37 : vector<2x10xf32>
    %39 = math.tanh %38 : vector<2x10xf32>
    %cst_17 = arith.constant 1.000000e+00 : f32
    %40 = vector.broadcast %cst_17 : f32 to vector<2x10xf32>
    %41 = arith.subf %40, %32 : vector<2x10xf32>
    %42 = arith.mulf %41, %39 : vector<2x10xf32>
    %43 = arith.mulf %32, %12 : vector<2x10xf32>
    %44 = arith.addf %42, %43 : vector<2x10xf32>
    %45 = arith.index_cast %c0_i32 : i32 to index
    %c0_18 = arith.constant 0 : index
    %c0_19 = arith.constant 0 : index
    %46 = vector.load %arg8[%45, %c0_18, %c0_19] : memref<8x2x10xf32, #tpu.memory_space<vmem>>, vector<1x2x10xf32>
    %47 = vector.shape_cast %46 : vector<1x2x10xf32> to vector<2x10xf32>
    %48 = vector.shape_cast %44 : vector<2x10xf32> to vector<1x2x10xf32>
    tpu.vector_store %arg8[%45, %c0_18, %c0_19], %48 {strides = array<i32>} : memref<8x2x10xf32, #tpu.memory_space<vmem>>, vector<1x2x10xf32>,
    %c1_i32 = arith.constant 1 : i32
    %49 = arith.index_cast %c1_i32 : i32 to index
    %c0_20 = arith.constant 0 : index
    %c0_21 = arith.constant 0 : index
    %50 = vector.load %arg7[%49, %c0_20, %c0_21] : memref<8x2x30xf32, #tpu.memory_space<vmem>>, vector<1x2x30xf32>
    %51 = vector.shape_cast %50 : vector<1x2x30xf32> to vector<2x30xf32>
    %cst_22 = arith.constant dense<0.000000e+00> : vector<2x30xf32>
    %52 = tpu.matmul %44, %1, %cst_22 {dimension_numbers = #tpu.dot_dimension_numbers<[1], [0], [0], [1], [0, 0, 1, 1], [], []>} : vector<2x10xf32>, vector<10x30xf32>, vector<2x30xf32> -> vector<2x30xf32>
    %53 = vector.extract_strided_slice %51 {offsets = [0, 0], sizes = [2, 10], strides = [1, 1]} : vector<2x30xf32> to vector<2x10xf32>
    %54 = vector.extract_strided_slice %52 {offsets = [0, 0], sizes = [2, 10], strides = [1, 1]} : vector<2x30xf32> to vector<2x10xf32>
    %55 = arith.addf %53, %54 : vector<2x10xf32>
    %56 = arith.negf %55 : vector<2x10xf32>
    %57 = math.exp %56 : vector<2x10xf32>
    %cst_23 = arith.constant 1.000000e+00 : f32
    %58 = vector.broadcast %cst_23 : f32 to vector<2x10xf32>
    %59 = arith.addf %58, %57 : vector<2x10xf32>
    %60 = arith.divf %58, %59 : vector<2x10xf32>
    %61 = vector.extract_strided_slice %51 {offsets = [0, 10], sizes = [2, 10], strides = [1, 1]} : vector<2x30xf32> to vector<2x10xf32>
    %62 = vector.extract_strided_slice %52 {offsets = [0, 10], sizes = [2, 10], strides = [1, 1]} : vector<2x30xf32> to vector<2x10xf32>
    %63 = arith.addf %61, %62 : vector<2x10xf32>
    %64 = arith.negf %63 : vector<2x10xf32>
    %65 = math.exp %64 : vector<2x10xf32>
    %cst_24 = arith.constant 1.000000e+00 : f32
    %66 = vector.broadcast %cst_24 : f32 to vector<2x10xf32>
    %67 = arith.addf %66, %65 : vector<2x10xf32>
    %68 = arith.divf %66, %67 : vector<2x10xf32>
    %69 = vector.extract_strided_slice %51 {offsets = [0, 20], sizes = [2, 10], strides = [1, 1]} : vector<2x30xf32> to vector<2x10xf32>
    %70 = vector.extract_strided_slice %52 {offsets = [0, 20], sizes = [2, 10], strides = [1, 1]} : vector<2x30xf32> to vector<2x10xf32>
    %71 = vector.broadcast %3 : vector<1x10xf32> to vector<2x10xf32>
    %72 = arith.addf %70, %71 : vector<2x10xf32>
    %73 = arith.mulf %60, %72 : vector<2x10xf32>
    %74 = arith.addf %69, %73 : vector<2x10xf32>
    %75 = math.tanh %74 : vector<2x10xf32>
    %cst_25 = arith.constant 1.000000e+00 : f32
    %76 = vector.broadcast %cst_25 : f32 to vector<2x10xf32>
    %77 = arith.subf %76, %68 : vector<2x10xf32>
    %78 = arith.mulf %77, %75 : vector<2x10xf32>
    %79 = arith.mulf %68, %44 : vector<2x10xf32>
    %80 = arith.addf %78, %79 : vector<2x10xf32>
    %81 = arith.index_cast %c1_i32 : i32 to index
    %c0_26 = arith.constant 0 : index
    %c0_27 = arith.constant 0 : index
    %82 = vector.load %arg8[%81, %c0_26, %c0_27] : memref<8x2x10xf32, #tpu.memory_space<vmem>>, vector<1x2x10xf32>
    %83 = vector.shape_cast %82 : vector<1x2x10xf32> to vector<2x10xf32>
    %84 = vector.shape_cast %80 : vector<2x10xf32> to vector<1x2x10xf32>
    tpu.vector_store %arg8[%81, %c0_26, %c0_27], %84 {strides = array<i32>} : memref<8x2x10xf32, #tpu.memory_space<vmem>>, vector<1x2x10xf32>,
    %c2_i32 = arith.constant 2 : i32
    %85 = arith.index_cast %c2_i32 : i32 to index
    %c0_28 = arith.constant 0 : index
    %c0_29 = arith.constant 0 : index
    %86 = vector.load %arg7[%85, %c0_28, %c0_29] : memref<8x2x30xf32, #tpu.memory_space<vmem>>, vector<1x2x30xf32>
    %87 = vector.shape_cast %86 : vector<1x2x30xf32> to vector<2x30xf32>
    %cst_30 = arith.constant dense<0.000000e+00> : vector<2x30xf32>
    %88 = tpu.matmul %80, %1, %cst_30 {dimension_numbers = #tpu.dot_dimension_numbers<[1], [0], [0], [1], [0, 0, 1, 1], [], []>} : vector<2x10xf32>, vector<10x30xf32>, vector<2x30xf32> -> vector<2x30xf32>
    %89 = vector.extract_strided_slice %87 {offsets = [0, 0], sizes = [2, 10], strides = [1, 1]} : vector<2x30xf32> to vector<2x10xf32>
    %90 = vector.extract_strided_slice %88 {offsets = [0, 0], sizes = [2, 10], strides = [1, 1]} : vector<2x30xf32> to vector<2x10xf32>
    %91 = arith.addf %89, %90 : vector<2x10xf32>
    %92 = arith.negf %91 : vector<2x10xf32>
    %93 = math.exp %92 : vector<2x10xf32>
    %cst_31 = arith.constant 1.000000e+00 : f32
    %94 = vector.broadcast %cst_31 : f32 to vector<2x10xf32>
    %95 = arith.addf %94, %93 : vector<2x10xf32>
    %96 = arith.divf %94, %95 : vector<2x10xf32>
    %97 = vector.extract_strided_slice %87 {offsets = [0, 10], sizes = [2, 10], strides = [1, 1]} : vector<2x30xf32> to vector<2x10xf32>
    %98 = vector.extract_strided_slice %88 {offsets = [0, 10], sizes = [2, 10], strides = [1, 1]} : vector<2x30xf32> to vector<2x10xf32>
    %99 = arith.addf %97, %98 : vector<2x10xf32>
    %100 = arith.negf %99 : vector<2x10xf32>
    %101 = math.exp %100 : vector<2x10xf32>
    %cst_32 = arith.constant 1.000000e+00 : f32
    %102 = vector.broadcast %cst_32 : f32 to vector<2x10xf32>
    %103 = arith.addf %102, %101 : vector<2x10xf32>
    %104 = arith.divf %102, %103 : vector<2x10xf32>
    %105 = vector.extract_strided_slice %87 {offsets = [0, 20], sizes = [2, 10], strides = [1, 1]} : vector<2x30xf32> to vector<2x10xf32>
    %106 = vector.extract_strided_slice %88 {offsets = [0, 20], sizes = [2, 10], strides = [1, 1]} : vector<2x30xf32> to vector<2x10xf32>
    %107 = vector.broadcast %3 : vector<1x10xf32> to vector<2x10xf32>
    %108 = arith.addf %106, %107 : vector<2x10xf32>
    %109 = arith.mulf %96, %108 : vector<2x10xf32>
    %110 = arith.addf %105, %109 : vector<2x10xf32>
    %111 = math.tanh %110 : vector<2x10xf32>
    %cst_33 = arith.constant 1.000000e+00 : f32
    %112 = vector.broadcast %cst_33 : f32 to vector<2x10xf32>
    %113 = arith.subf %112, %104 : vector<2x10xf32>
    %114 = arith.mulf %113, %111 : vector<2x10xf32>
    %115 = arith.mulf %104, %80 : vector<2x10xf32>
    %116 = arith.addf %114, %115 : vector<2x10xf32>
    %117 = arith.index_cast %c2_i32 : i32 to index
    %c0_34 = arith.constant 0 : index
    %c0_35 = arith.constant 0 : index
    %118 = vector.load %arg8[%117, %c0_34, %c0_35] : memref<8x2x10xf32, #tpu.memory_space<vmem>>, vector<1x2x10xf32>
    %119 = vector.shape_cast %118 : vector<1x2x10xf32> to vector<2x10xf32>
    %120 = vector.shape_cast %116 : vector<2x10xf32> to vector<1x2x10xf32>
    tpu.vector_store %arg8[%117, %c0_34, %c0_35], %120 {strides = array<i32>} : memref<8x2x10xf32, #tpu.memory_space<vmem>>, vector<1x2x10xf32>,
    %c3_i32 = arith.constant 3 : i32
    %121 = arith.index_cast %c3_i32 : i32 to index
    %c0_36 = arith.constant 0 : index
    %c0_37 = arith.constant 0 : index
    %122 = vector.load %arg7[%121, %c0_36, %c0_37] : memref<8x2x30xf32, #tpu.memory_space<vmem>>, vector<1x2x30xf32>
    %123 = vector.shape_cast %122 : vector<1x2x30xf32> to vector<2x30xf32>
    %cst_38 = arith.constant dense<0.000000e+00> : vector<2x30xf32>
    %124 = tpu.matmul %116, %1, %cst_38 {dimension_numbers = #tpu.dot_dimension_numbers<[1], [0], [0], [1], [0, 0, 1, 1], [], []>} : vector<2x10xf32>, vector<10x30xf32>, vector<2x30xf32> -> vector<2x30xf32>
    %125 = vector.extract_strided_slice %123 {offsets = [0, 0], sizes = [2, 10], strides = [1, 1]} : vector<2x30xf32> to vector<2x10xf32>
    %126 = vector.extract_strided_slice %124 {offsets = [0, 0], sizes = [2, 10], strides = [1, 1]} : vector<2x30xf32> to vector<2x10xf32>
    %127 = arith.addf %125, %126 : vector<2x10xf32>
    %128 = arith.negf %127 : vector<2x10xf32>
    %129 = math.exp %128 : vector<2x10xf32>
    %cst_39 = arith.constant 1.000000e+00 : f32
    %130 = vector.broadcast %cst_39 : f32 to vector<2x10xf32>
    %131 = arith.addf %130, %129 : vector<2x10xf32>
    %132 = arith.divf %130, %131 : vector<2x10xf32>
    %133 = vector.extract_strided_slice %123 {offsets = [0, 10], sizes = [2, 10], strides = [1, 1]} : vector<2x30xf32> to vector<2x10xf32>
    %134 = vector.extract_strided_slice %124 {offsets = [0, 10], sizes = [2, 10], strides = [1, 1]} : vector<2x30xf32> to vector<2x10xf32>
    %135 = arith.addf %133, %134 : vector<2x10xf32>
    %136 = arith.negf %135 : vector<2x10xf32>
    %137 = math.exp %136 : vector<2x10xf32>
    %cst_40 = arith.constant 1.000000e+00 : f32
    %138 = vector.broadcast %cst_40 : f32 to vector<2x10xf32>
    %139 = arith.addf %138, %137 : vector<2x10xf32>
    %140 = arith.divf %138, %139 : vector<2x10xf32>
    %141 = vector.extract_strided_slice %123 {offsets = [0, 20], sizes = [2, 10], strides = [1, 1]} : vector<2x30xf32> to vector<2x10xf32>
    %142 = vector.extract_strided_slice %124 {offsets = [0, 20], sizes = [2, 10], strides = [1, 1]} : vector<2x30xf32> to vector<2x10xf32>
    %143 = vector.broadcast %3 : vector<1x10xf32> to vector<2x10xf32>
    %144 = arith.addf %142, %143 : vector<2x10xf32>
    %145 = arith.mulf %132, %144 : vector<2x10xf32>
    %146 = arith.addf %141, %145 : vector<2x10xf32>
    %147 = math.tanh %146 : vector<2x10xf32>
    %cst_41 = arith.constant 1.000000e+00 : f32
    %148 = vector.broadcast %cst_41 : f32 to vector<2x10xf32>
    %149 = arith.subf %148, %140 : vector<2x10xf32>
    %150 = arith.mulf %149, %147 : vector<2x10xf32>
    %151 = arith.mulf %140, %116 : vector<2x10xf32>
    %152 = arith.addf %150, %151 : vector<2x10xf32>
    %153 = arith.index_cast %c3_i32 : i32 to index
    %c0_42 = arith.constant 0 : index
    %c0_43 = arith.constant 0 : index
    %154 = vector.load %arg8[%153, %c0_42, %c0_43] : memref<8x2x10xf32, #tpu.memory_space<vmem>>, vector<1x2x10xf32>
    %155 = vector.shape_cast %154 : vector<1x2x10xf32> to vector<2x10xf32>
    %156 = vector.shape_cast %152 : vector<2x10xf32> to vector<1x2x10xf32>
    tpu.vector_store %arg8[%153, %c0_42, %c0_43], %156 {strides = array<i32>} : memref<8x2x10xf32, #tpu.memory_space<vmem>>, vector<1x2x10xf32>,
    %c4_i32 = arith.constant 4 : i32
    %157 = arith.index_cast %c4_i32 : i32 to index
    %c0_44 = arith.constant 0 : index
    %c0_45 = arith.constant 0 : index
    %158 = vector.load %arg7[%157, %c0_44, %c0_45] : memref<8x2x30xf32, #tpu.memory_space<vmem>>, vector<1x2x30xf32>
    %159 = vector.shape_cast %158 : vector<1x2x30xf32> to vector<2x30xf32>
    %cst_46 = arith.constant dense<0.000000e+00> : vector<2x30xf32>
    %160 = tpu.matmul %152, %1, %cst_46 {dimension_numbers = #tpu.dot_dimension_numbers<[1], [0], [0], [1], [0, 0, 1, 1], [], []>} : vector<2x10xf32>, vector<10x30xf32>, vector<2x30xf32> -> vector<2x30xf32>
    %161 = vector.extract_strided_slice %159 {offsets = [0, 0], sizes = [2, 10], strides = [1, 1]} : vector<2x30xf32> to vector<2x10xf32>
    %162 = vector.extract_strided_slice %160 {offsets = [0, 0], sizes = [2, 10], strides = [1, 1]} : vector<2x30xf32> to vector<2x10xf32>
    %163 = arith.addf %161, %162 : vector<2x10xf32>
    %164 = arith.negf %163 : vector<2x10xf32>
    %165 = math.exp %164 : vector<2x10xf32>
    %cst_47 = arith.constant 1.000000e+00 : f32
    %166 = vector.broadcast %cst_47 : f32 to vector<2x10xf32>
    %167 = arith.addf %166, %165 : vector<2x10xf32>
    %168 = arith.divf %166, %167 : vector<2x10xf32>
    %169 = vector.extract_strided_slice %159 {offsets = [0, 10], sizes = [2, 10], strides = [1, 1]} : vector<2x30xf32> to vector<2x10xf32>
    %170 = vector.extract_strided_slice %160 {offsets = [0, 10], sizes = [2, 10], strides = [1, 1]} : vector<2x30xf32> to vector<2x10xf32>
    %171 = arith.addf %169, %170 : vector<2x10xf32>
    %172 = arith.negf %171 : vector<2x10xf32>
    %173 = math.exp %172 : vector<2x10xf32>
    %cst_48 = arith.constant 1.000000e+00 : f32
    %174 = vector.broadcast %cst_48 : f32 to vector<2x10xf32>
    %175 = arith.addf %174, %173 : vector<2x10xf32>
    %176 = arith.divf %174, %175 : vector<2x10xf32>
    %177 = vector.extract_strided_slice %159 {offsets = [0, 20], sizes = [2, 10], strides = [1, 1]} : vector<2x30xf32> to vector<2x10xf32>
    %178 = vector.extract_strided_slice %160 {offsets = [0, 20], sizes = [2, 10], strides = [1, 1]} : vector<2x30xf32> to vector<2x10xf32>
    %179 = vector.broadcast %3 : vector<1x10xf32> to vector<2x10xf32>
    %180 = arith.addf %178, %179 : vector<2x10xf32>
    %181 = arith.mulf %168, %180 : vector<2x10xf32>
    %182 = arith.addf %177, %181 : vector<2x10xf32>
    %183 = math.tanh %182 : vector<2x10xf32>
    %cst_49 = arith.constant 1.000000e+00 : f32
    %184 = vector.broadcast %cst_49 : f32 to vector<2x10xf32>
    %185 = arith.subf %184, %176 : vector<2x10xf32>
    %186 = arith.mulf %185, %183 : vector<2x10xf32>
    %187 = arith.mulf %176, %152 : vector<2x10xf32>
    %188 = arith.addf %186, %187 : vector<2x10xf32>
    %189 = arith.index_cast %c4_i32 : i32 to index
    %c0_50 = arith.constant 0 : index
    %c0_51 = arith.constant 0 : index
    %190 = vector.load %arg8[%189, %c0_50, %c0_51] : memref<8x2x10xf32, #tpu.memory_space<vmem>>, vector<1x2x10xf32>
    %191 = vector.shape_cast %190 : vector<1x2x10xf32> to vector<2x10xf32>
    %192 = vector.shape_cast %188 : vector<2x10xf32> to vector<1x2x10xf32>
    tpu.vector_store %arg8[%189, %c0_50, %c0_51], %192 {strides = array<i32>} : memref<8x2x10xf32, #tpu.memory_space<vmem>>, vector<1x2x10xf32>,
    %c5_i32 = arith.constant 5 : i32
    %193 = arith.index_cast %c5_i32 : i32 to index
    %c0_52 = arith.constant 0 : index
    %c0_53 = arith.constant 0 : index
    %194 = vector.load %arg7[%193, %c0_52, %c0_53] : memref<8x2x30xf32, #tpu.memory_space<vmem>>, vector<1x2x30xf32>
    %195 = vector.shape_cast %194 : vector<1x2x30xf32> to vector<2x30xf32>
    %cst_54 = arith.constant dense<0.000000e+00> : vector<2x30xf32>
    %196 = tpu.matmul %188, %1, %cst_54 {dimension_numbers = #tpu.dot_dimension_numbers<[1], [0], [0], [1], [0, 0, 1, 1], [], []>} : vector<2x10xf32>, vector<10x30xf32>, vector<2x30xf32> -> vector<2x30xf32>
    %197 = vector.extract_strided_slice %195 {offsets = [0, 0], sizes = [2, 10], strides = [1, 1]} : vector<2x30xf32> to vector<2x10xf32>
    %198 = vector.extract_strided_slice %196 {offsets = [0, 0], sizes = [2, 10], strides = [1, 1]} : vector<2x30xf32> to vector<2x10xf32>
    %199 = arith.addf %197, %198 : vector<2x10xf32>
    %200 = arith.negf %199 : vector<2x10xf32>
    %201 = math.exp %200 : vector<2x10xf32>
    %cst_55 = arith.constant 1.000000e+00 : f32
    %202 = vector.broadcast %cst_55 : f32 to vector<2x10xf32>
    %203 = arith.addf %202, %201 : vector<2x10xf32>
    %204 = arith.divf %202, %203 : vector<2x10xf32>
    %205 = vector.extract_strided_slice %195 {offsets = [0, 10], sizes = [2, 10], strides = [1, 1]} : vector<2x30xf32> to vector<2x10xf32>
    %206 = vector.extract_strided_slice %196 {offsets = [0, 10], sizes = [2, 10], strides = [1, 1]} : vector<2x30xf32> to vector<2x10xf32>
    %207 = arith.addf %205, %206 : vector<2x10xf32>
    %208 = arith.negf %207 : vector<2x10xf32>
    %209 = math.exp %208 : vector<2x10xf32>
    %cst_56 = arith.constant 1.000000e+00 : f32
    %210 = vector.broadcast %cst_56 : f32 to vector<2x10xf32>
    %211 = arith.addf %210, %209 : vector<2x10xf32>
    %212 = arith.divf %210, %211 : vector<2x10xf32>
    %213 = vector.extract_strided_slice %195 {offsets = [0, 20], sizes = [2, 10], strides = [1, 1]} : vector<2x30xf32> to vector<2x10xf32>
    %214 = vector.extract_strided_slice %196 {offsets = [0, 20], sizes = [2, 10], strides = [1, 1]} : vector<2x30xf32> to vector<2x10xf32>
    %215 = vector.broadcast %3 : vector<1x10xf32> to vector<2x10xf32>
    %216 = arith.addf %214, %215 : vector<2x10xf32>
    %217 = arith.mulf %204, %216 : vector<2x10xf32>
    %218 = arith.addf %213, %217 : vector<2x10xf32>
    %219 = math.tanh %218 : vector<2x10xf32>
    %cst_57 = arith.constant 1.000000e+00 : f32
    %220 = vector.broadcast %cst_57 : f32 to vector<2x10xf32>
    %221 = arith.subf %220, %212 : vector<2x10xf32>
    %222 = arith.mulf %221, %219 : vector<2x10xf32>
    %223 = arith.mulf %212, %188 : vector<2x10xf32>
    %224 = arith.addf %222, %223 : vector<2x10xf32>
    %225 = arith.index_cast %c5_i32 : i32 to index
    %c0_58 = arith.constant 0 : index
    %c0_59 = arith.constant 0 : index
    %226 = vector.load %arg8[%225, %c0_58, %c0_59] : memref<8x2x10xf32, #tpu.memory_space<vmem>>, vector<1x2x10xf32>
    %227 = vector.shape_cast %226 : vector<1x2x10xf32> to vector<2x10xf32>
    %228 = vector.shape_cast %224 : vector<2x10xf32> to vector<1x2x10xf32>
    tpu.vector_store %arg8[%225, %c0_58, %c0_59], %228 {strides = array<i32>} : memref<8x2x10xf32, #tpu.memory_space<vmem>>, vector<1x2x10xf32>,
    %c6_i32 = arith.constant 6 : i32
    %229 = arith.index_cast %c6_i32 : i32 to index
    %c0_60 = arith.constant 0 : index
    %c0_61 = arith.constant 0 : index
    %230 = vector.load %arg7[%229, %c0_60, %c0_61] : memref<8x2x30xf32, #tpu.memory_space<vmem>>, vector<1x2x30xf32>
    %231 = vector.shape_cast %230 : vector<1x2x30xf32> to vector<2x30xf32>
    %cst_62 = arith.constant dense<0.000000e+00> : vector<2x30xf32>
    %232 = tpu.matmul %224, %1, %cst_62 {dimension_numbers = #tpu.dot_dimension_numbers<[1], [0], [0], [1], [0, 0, 1, 1], [], []>} : vector<2x10xf32>, vector<10x30xf32>, vector<2x30xf32> -> vector<2x30xf32>
    %233 = vector.extract_strided_slice %231 {offsets = [0, 0], sizes = [2, 10], strides = [1, 1]} : vector<2x30xf32> to vector<2x10xf32>
    %234 = vector.extract_strided_slice %232 {offsets = [0, 0], sizes = [2, 10], strides = [1, 1]} : vector<2x30xf32> to vector<2x10xf32>
    %235 = arith.addf %233, %234 : vector<2x10xf32>
    %236 = arith.negf %235 : vector<2x10xf32>
    %237 = math.exp %236 : vector<2x10xf32>
    %cst_63 = arith.constant 1.000000e+00 : f32
    %238 = vector.broadcast %cst_63 : f32 to vector<2x10xf32>
    %239 = arith.addf %238, %237 : vector<2x10xf32>
    %240 = arith.divf %238, %239 : vector<2x10xf32>
    %241 = vector.extract_strided_slice %231 {offsets = [0, 10], sizes = [2, 10], strides = [1, 1]} : vector<2x30xf32> to vector<2x10xf32>
    %242 = vector.extract_strided_slice %232 {offsets = [0, 10], sizes = [2, 10], strides = [1, 1]} : vector<2x30xf32> to vector<2x10xf32>
    %243 = arith.addf %241, %242 : vector<2x10xf32>
    %244 = arith.negf %243 : vector<2x10xf32>
    %245 = math.exp %244 : vector<2x10xf32>
    %cst_64 = arith.constant 1.000000e+00 : f32
    %246 = vector.broadcast %cst_64 : f32 to vector<2x10xf32>
    %247 = arith.addf %246, %245 : vector<2x10xf32>
    %248 = arith.divf %246, %247 : vector<2x10xf32>
    %249 = vector.extract_strided_slice %231 {offsets = [0, 20], sizes = [2, 10], strides = [1, 1]} : vector<2x30xf32> to vector<2x10xf32>
    %250 = vector.extract_strided_slice %232 {offsets = [0, 20], sizes = [2, 10], strides = [1, 1]} : vector<2x30xf32> to vector<2x10xf32>
    %251 = vector.broadcast %3 : vector<1x10xf32> to vector<2x10xf32>
    %252 = arith.addf %250, %251 : vector<2x10xf32>
    %253 = arith.mulf %240, %252 : vector<2x10xf32>
    %254 = arith.addf %249, %253 : vector<2x10xf32>
    %255 = math.tanh %254 : vector<2x10xf32>
    %cst_65 = arith.constant 1.000000e+00 : f32
    %256 = vector.broadcast %cst_65 : f32 to vector<2x10xf32>
    %257 = arith.subf %256, %248 : vector<2x10xf32>
    %258 = arith.mulf %257, %255 : vector<2x10xf32>
    %259 = arith.mulf %248, %224 : vector<2x10xf32>
    %260 = arith.addf %258, %259 : vector<2x10xf32>
    %261 = arith.index_cast %c6_i32 : i32 to index
    %c0_66 = arith.constant 0 : index
    %c0_67 = arith.constant 0 : index
    %262 = vector.load %arg8[%261, %c0_66, %c0_67] : memref<8x2x10xf32, #tpu.memory_space<vmem>>, vector<1x2x10xf32>
    %263 = vector.shape_cast %262 : vector<1x2x10xf32> to vector<2x10xf32>
    %264 = vector.shape_cast %260 : vector<2x10xf32> to vector<1x2x10xf32>
    tpu.vector_store %arg8[%261, %c0_66, %c0_67], %264 {strides = array<i32>} : memref<8x2x10xf32, #tpu.memory_space<vmem>>, vector<1x2x10xf32>,
    %c7_i32 = arith.constant 7 : i32
    %265 = arith.index_cast %c7_i32 : i32 to index
    %c0_68 = arith.constant 0 : index
    %c0_69 = arith.constant 0 : index
    %266 = vector.load %arg7[%265, %c0_68, %c0_69] : memref<8x2x30xf32, #tpu.memory_space<vmem>>, vector<1x2x30xf32>
    %267 = vector.shape_cast %266 : vector<1x2x30xf32> to vector<2x30xf32>
    %cst_70 = arith.constant dense<0.000000e+00> : vector<2x30xf32>
    %268 = tpu.matmul %260, %1, %cst_70 {dimension_numbers = #tpu.dot_dimension_numbers<[1], [0], [0], [1], [0, 0, 1, 1], [], []>} : vector<2x10xf32>, vector<10x30xf32>, vector<2x30xf32> -> vector<2x30xf32>
    %269 = vector.extract_strided_slice %267 {offsets = [0, 0], sizes = [2, 10], strides = [1, 1]} : vector<2x30xf32> to vector<2x10xf32>
    %270 = vector.extract_strided_slice %268 {offsets = [0, 0], sizes = [2, 10], strides = [1, 1]} : vector<2x30xf32> to vector<2x10xf32>
    %271 = arith.addf %269, %270 : vector<2x10xf32>
    %272 = arith.negf %271 : vector<2x10xf32>
    %273 = math.exp %272 : vector<2x10xf32>
    %cst_71 = arith.constant 1.000000e+00 : f32
    %274 = vector.broadcast %cst_71 : f32 to vector<2x10xf32>
    %275 = arith.addf %274, %273 : vector<2x10xf32>
    %276 = arith.divf %274, %275 : vector<2x10xf32>
    %277 = vector.extract_strided_slice %267 {offsets = [0, 10], sizes = [2, 10], strides = [1, 1]} : vector<2x30xf32> to vector<2x10xf32>
    %278 = vector.extract_strided_slice %268 {offsets = [0, 10], sizes = [2, 10], strides = [1, 1]} : vector<2x30xf32> to vector<2x10xf32>
    %279 = arith.addf %277, %278 : vector<2x10xf32>
    %280 = arith.negf %279 : vector<2x10xf32>
    %281 = math.exp %280 : vector<2x10xf32>
    %cst_72 = arith.constant 1.000000e+00 : f32
    %282 = vector.broadcast %cst_72 : f32 to vector<2x10xf32>
    %283 = arith.addf %282, %281 : vector<2x10xf32>
    %284 = arith.divf %282, %283 : vector<2x10xf32>
    %285 = vector.extract_strided_slice %267 {offsets = [0, 20], sizes = [2, 10], strides = [1, 1]} : vector<2x30xf32> to vector<2x10xf32>
    %286 = vector.extract_strided_slice %268 {offsets = [0, 20], sizes = [2, 10], strides = [1, 1]} : vector<2x30xf32> to vector<2x10xf32>
    %287 = vector.broadcast %3 : vector<1x10xf32> to vector<2x10xf32>
    %288 = arith.addf %286, %287 : vector<2x10xf32>
    %289 = arith.mulf %276, %288 : vector<2x10xf32>
    %290 = arith.addf %285, %289 : vector<2x10xf32>
    %291 = math.tanh %290 : vector<2x10xf32>
    %cst_73 = arith.constant 1.000000e+00 : f32
    %292 = vector.broadcast %cst_73 : f32 to vector<2x10xf32>
    %293 = arith.subf %292, %284 : vector<2x10xf32>
    %294 = arith.mulf %293, %291 : vector<2x10xf32>
    %295 = arith.mulf %284, %260 : vector<2x10xf32>
    %296 = arith.addf %294, %295 : vector<2x10xf32>
    %297 = arith.index_cast %c7_i32 : i32 to index
    %c0_74 = arith.constant 0 : index
    %c0_75 = arith.constant 0 : index
    %298 = vector.load %arg8[%297, %c0_74, %c0_75] : memref<8x2x10xf32, #tpu.memory_space<vmem>>, vector<1x2x10xf32>
    %299 = vector.shape_cast %298 : vector<1x2x10xf32> to vector<2x10xf32>
    %300 = vector.shape_cast %296 : vector<2x10xf32> to vector<1x2x10xf32>
    tpu.vector_store %arg8[%297, %c0_74, %c0_75], %300 {strides = array<i32>} : memref<8x2x10xf32, #tpu.memory_space<vmem>>, vector<1x2x10xf32>,
    %c8_i32 = arith.constant 8 : i32
    %c0_76 = arith.constant 0 : index
    %c0_77 = arith.constant 0 : index
    %301 = vector.load %arg4[%c0_76, %c0_77] : memref<13x10xf32, #tpu.memory_space<vmem>>, vector<10x10xf32>
    %c10 = arith.constant 10 : index
    %c0_78 = arith.constant 0 : index
    %302 = vector.load %arg4[%c10, %c0_78] : memref<13x10xf32, #tpu.memory_space<vmem>>, vector<1x10xf32>
    %c11 = arith.constant 11 : index
    %c0_79 = arith.constant 0 : index
    %303 = vector.load %arg4[%c11, %c0_79] : memref<13x10xf32, #tpu.memory_space<vmem>>, vector<1x10xf32>
    %c12 = arith.constant 12 : index
    %c0_80 = arith.constant 0 : index
    %304 = vector.load %arg4[%c12, %c0_80] : memref<13x10xf32, #tpu.memory_space<vmem>>, vector<1x1xf32>
    %c0_81 = arith.constant 0 : index
    %c0_82 = arith.constant 0 : index
    %c0_83 = arith.constant 0 : index
    %305 = vector.load %arg8[%c0_81, %c0_82, %c0_83] : memref<8x2x10xf32, #tpu.memory_space<vmem>>, vector<8x2x10xf32>
    %306 = vector.shape_cast %305 : vector<8x2x10xf32> to vector<16x10xf32>
    %cst_84 = arith.constant dense<0.000000e+00> : vector<16x10xf32>
    %307 = tpu.matmul %306, %301, %cst_84 {dimension_numbers = #tpu.dot_dimension_numbers<[1], [0], [0], [1], [0, 0, 1, 1], [], []>} : vector<16x10xf32>, vector<10x10xf32>, vector<16x10xf32> -> vector<16x10xf32>
    %308 = vector.broadcast %302 : vector<1x10xf32> to vector<16x10xf32>
    %309 = arith.addf %307, %308 : vector<16x10xf32>
    %cst_85 = arith.constant 0.000000e+00 : f32
    %310 = vector.broadcast %cst_85 : f32 to vector<16x10xf32>
    %311 = arith.maximumf %309, %310 : vector<16x10xf32>
    %312 = vector.broadcast %303 : vector<1x10xf32> to vector<16x10xf32>
    %313 = arith.mulf %311, %312 : vector<16x10xf32>
    %cst_86 = arith.constant dense<0.000000e+00> : vector<16xf32>
    %314 = vector.multi_reduction <add>, %313, %cst_86 [1] : vector<16x10xf32> to vector<16xf32>
    %315 = vector.shape_cast %314 : vector<16xf32> to vector<16x1xf32>
    %316 = vector.broadcast %304 : vector<1x1xf32> to vector<16x1xf32>
    %317 = arith.addf %315, %316 : vector<16x1xf32>
    %c0_87 = arith.constant 0 : index
    %c0_88 = arith.constant 0 : index
    %318 = vector.load %arg5[%c0_87, %c0_88] : memref<16x1xf32, #tpu.memory_space<vmem>>, vector<16x1xf32>
    tpu.vector_store %arg5[%c0_87, %c0_88], %317 {strides = array<i32>} : memref<16x1xf32, #tpu.memory_space<vmem>>, vector<16x1xf32>,
    %c0_89 = arith.constant 0 : index
    %c0_90 = arith.constant 0 : index
    %c0_91 = arith.constant 0 : index
    %319 = vector.load %arg6[%c0_89, %c0_90, %c0_91] : memref<1x2x10xf32, #tpu.memory_space<vmem>>, vector<1x2x10xf32>
    %320 = vector.shape_cast %319 : vector<1x2x10xf32> to vector<2x10xf32>
    %321 = vector.shape_cast %296 : vector<2x10xf32> to vector<1x2x10xf32>
    tpu.vector_store %arg6[%c0_89, %c0_90, %c0_91], %321 {strides = array<i32>} : memref<1x2x10xf32, #tpu.memory_space<vmem>>, vector<1x2x10xf32>,
    return
  }
  func.func @transform_0(%arg0: i32) -> (i32, i32, i32) {
    %c0_i32 = arith.constant 0 : i32
    %c0_i32_0 = arith.constant 0 : i32
    %c0_i32_1 = arith.constant 0 : i32
    %c0_i32_2 = arith.constant 0 : i32
    return %c0_i32, %c0_i32_0, %c0_i32_1 : i32, i32, i32
  }
  func.func @transform_1(%arg0: i32) -> (i32, i32, i32) {
    %c0_i32 = arith.constant 0 : i32
    %c0_i32_0 = arith.constant 0 : i32
    %c0_i32_1 = arith.constant 0 : i32
    %c0_i32_2 = arith.constant 0 : i32
    return %c0_i32, %c0_i32_0, %c0_i32_1 : i32, i32, i32
  }
  func.func @transform_2(%arg0: i32) -> (i32, i32) {
    %c0_i32 = arith.constant 0 : i32
    %c0_i32_0 = arith.constant 0 : i32
    %c0_i32_1 = arith.constant 0 : i32
    return %c0_i32, %c0_i32_0 : i32, i32
  }
  func.func @transform_3(%arg0: i32) -> (i32, i32) {
    %c0_i32 = arith.constant 0 : i32
    %c0_i32_0 = arith.constant 0 : i32
    %c0_i32_1 = arith.constant 0 : i32
    return %c0_i32, %c0_i32_0 : i32, i32
  }
  func.func @transform_4(%arg0: i32) -> (i32, i32) {
    %c0_i32 = arith.constant 0 : i32
    %c0_i32_0 = arith.constant 0 : i32
    %c0_i32_1 = arith.constant 0 : i32
    return %c0_i32, %c0_i32_0 : i32, i32
  }
  func.func @transform_5(%arg0: i32) -> (i32, i32, i32) {
    %c0_i32 = arith.constant 0 : i32
    %c0_i32_0 = arith.constant 0 : i32
    %c0_i32_1 = arith.constant 0 : i32
    %c0_i32_2 = arith.constant 0 : i32
    return %c0_i32, %c0_i32_0, %c0_i32_1 : i32, i32, i32
  }
}

</mosaic_0001>

<llo_original>
// kernel: tpu_custom_call.1
$region0: #{tpu_custom_call.1}
  #allocation0 [shape = 'u32[]', space=smem, size = 0x4, offset = 0x4, fixed_abs, tag = 'smem constant byte address 0x4 - core index']
  #allocation1 [shape = 'u32[144,128]{1,0:T(1,128)}', space=vmem, size = 0x12000, scoped, tag = 'internal scratch']
  #allocation2 [shape = 'f32[8,2,30]{2,1,0:T(2,128)}', space=vmem, size = 0x2000, scoped, tag = 'scratch operand']
  #allocation3 [shape = 'f32[8,2,10]{2,1,0:T(2,128)}', space=vmem, size = 0x2000, scoped, tag = 'scratch operand']
  %s0 = inlined_call_operand.hbm [shape: f32[8,2,16], index: 0, kind: input, shape index: {}]
  %s1 = inlined_call_operand.hbm [shape: f32[1,2,10], index: 1, kind: input, shape index: {}]
  %s2 = inlined_call_operand.hbm [shape: f32[28,30], index: 2, kind: input, shape index: {}]
  %s3 = inlined_call_operand.hbm [shape: f32[13,10], index: 3, kind: input, shape index: {}]
  %s4 = inlined_call_operand.vmem [shape: f32[16,1], index: 4, kind: output, shape index: {0}]
  %s5 = inlined_call_operand.hbm [shape: f32[1,2,10], index: 5, kind: output, shape index: {1}]
  %6 = xla_tuple %s4, %s5
  %s7 = sld [smem:[#allocation0]]
  $region50: #{tpu_custom_call.1} parent=0
    _
  %s9 = ssub.s32 1, %s7
  %s10 = scalar_select 0, %s9, %s7
  $region1: #{tpu_custom_call.1} parent=0
    #allocation4 [shape = 'u8[8192]{0}', space=vmem, size = 0x2000, scoped, tag = 'input window, operand 0, single buffered']
    #allocation5 [shape = 's32[1]{0}', space=sflag, size = 0x4, scoped, tag = 'scoped memory for tpu_custom_call.1']
    #allocation6 [shape = 's32[1]{0}', space=sflag, size = 0x4, scoped, tag = 'scoped memory for tpu_custom_call.1']
    #allocation7 [shape = 'u8[1024]{0}', space=vmem, size = 0x400, scoped, tag = 'input window, operand 1, single buffered']
    #allocation8 [shape = 's32[1]{0}', space=sflag, size = 0x4, scoped, tag = 'scoped memory for tpu_custom_call.1']
    #allocation9 [shape = 'u8[16384]{0}', space=vmem, size = 0x4000, scoped, tag = 'input window, operand 2, single buffered']
    #allocation10 [shape = 'u8[8192]{0}', space=vmem, size = 0x2000, scoped, tag = 'input window, operand 3, single buffered']
    #allocation11 [shape = 's32[1]{0}', space=sflag, size = 0x4, scoped, tag = 'scoped memory for tpu_custom_call.1']
    #allocation12 [shape = 'u8[1024]{0}', space=vmem, size = 0x400, scoped, tag = 'output window, operand 1, single buffered']
    %11 = vsyncpa [#allocation5], 0
    %12 = vsyncpa [#allocation8], 0
    %13 = vsyncpa [#allocation11], 0
    %14 = vsyncpa [#allocation6], 0
    // Predicated region
    $region2: #{tpu_custom_call.1} parent=1 // pred_check
      _
    $region3: #{tpu_custom_call.1} parent=1 // pred_check_branch
      %16 = sbr.rel (0) target = $region5
    $region4: #{tpu_custom_call.1} parent=1 // pred_region
      %s18 = ssub.s32 256, 256
      %19 = vsyncadd [#allocation5], %s18
      %s20 = sshll.u32 [#allocation4], 4
      %s21 = int_to_ptr.vmem [resolvable:$true] %s20
      %26 = dma.hbm_to_vmem [thread:$0]  %s0, 256, %s21, [#allocation5], 32, 32, 2
    $region5: #{tpu_custom_call.1} parent=1 // pred_fallthru
      _
    // Predicated region
    $region6: #{tpu_custom_call.1} parent=1 // pred_check
      _
    $region7: #{tpu_custom_call.1} parent=1 // pred_check_branch
      %28 = sbr.rel (0) target = $region9
    $region8: #{tpu_custom_call.1} parent=1 // pred_region
      %s30 = ssub.s32 32, 32
      %31 = vsyncadd [#allocation8], %s30
      %s33 = sshll.u32 [#allocation7], 4
      %s34 = int_to_ptr.vmem [resolvable:$true] %s33
      %36 = dma.hbm_to_vmem [thread:$0]  %s1, 32, %s34, [#allocation8]
    $region9: #{tpu_custom_call.1} parent=1 // pred_fallthru
      _
    // Predicated region
    $region10: #{tpu_custom_call.1} parent=1 // pred_check
      _
    $region11: #{tpu_custom_call.1} parent=1 // pred_check_branch
      %38 = sbr.rel (0) target = $region13
    $region12: #{tpu_custom_call.1} parent=1 // pred_region
      %s40 = ssub.s32 512, 512
      %41 = vsyncadd [#allocation8], %s40
      %s42 = sshll.u32 [#allocation9], 4
      %s43 = int_to_ptr.vmem [resolvable:$true] %s42
      %48 = dma.hbm_to_vmem [thread:$0]  %s2, 512, %s43, [#allocation8], 128, 128, 8
    $region13: #{tpu_custom_call.1} parent=1 // pred_fallthru
      _
    // Predicated region
    $region14: #{tpu_custom_call.1} parent=1 // pred_check
      _
    $region15: #{tpu_custom_call.1} parent=1 // pred_check_branch
      %50 = sbr.rel (0) target = $region17
    $region16: #{tpu_custom_call.1} parent=1 // pred_region
      %s52 = ssub.s32 256, 256
      %53 = vsyncadd [#allocation11], %s52
      %s54 = sshll.u32 [#allocation10], 4
      %s55 = int_to_ptr.vmem [resolvable:$true] %s54
      %60 = dma.hbm_to_vmem [thread:$0]  %s3, 256, %s55, [#allocation11], 128, 128, 8
    $region17: #{tpu_custom_call.1} parent=1 // pred_fallthru
      _
    // Predicated region
    $region18: #{tpu_custom_call.1} parent=1 // pred_check
      _
    $region19: #{tpu_custom_call.1} parent=1 // pred_check_branch
      %62 = sbr.rel (0) target = $region21
    $region20: #{tpu_custom_call.1} parent=1 // pred_region
      %63 = dma.done [#allocation5], 256
    $region21: #{tpu_custom_call.1} parent=1 // pred_fallthru
      _
    // Predicated region
    $region22: #{tpu_custom_call.1} parent=1 // pred_check
      _
    $region23: #{tpu_custom_call.1} parent=1 // pred_check_branch
      %65 = sbr.rel (0) target = $region25
    $region24: #{tpu_custom_call.1} parent=1 // pred_region
      %66 = dma.done [#allocation8], 32
    $region25: #{tpu_custom_call.1} parent=1 // pred_fallthru
      _
    // Predicated region
    $region26: #{tpu_custom_call.1} parent=1 // pred_check
      _
    $region27: #{tpu_custom_call.1} parent=1 // pred_check_branch
      %68 = sbr.rel (0) target = $region29
    $region28: #{tpu_custom_call.1} parent=1 // pred_region
      %69 = dma.done [#allocation8], 512
    $region29: #{tpu_custom_call.1} parent=1 // pred_fallthru
      _
    // Predicated region
    $region30: #{tpu_custom_call.1} parent=1 // pred_check
      _
    $region31: #{tpu_custom_call.1} parent=1 // pred_check_branch
      %71 = sbr.rel (0) target = $region33
    $region32: #{tpu_custom_call.1} parent=1 // pred_region
      %72 = dma.done [#allocation11], 256
    $region33: #{tpu_custom_call.1} parent=1 // pred_fallthru
      _
    %v73 = vld [vmem:[#allocation9] sm:$0xff]
    %v74 = vld [vmem:[#allocation9 + $0x8] sm:$0xff]
    %v75 = vld [vmem:[#allocation9 + $0x10] sm:$0xff]
    %v76 = vld [vmem:[#allocation9 + $0x18] sm:$0x3]
    %v77 = vld [vmem:[#allocation9 + $0x1a] sm:$0x1]
    %v78 = vld [vmem:[#allocation9 + $0x1b] sm:$0x1]
    %v79 = vld [vmem:[#allocation4] sm:$0x3]
    %v80 = vld [vmem:[#allocation4 + $0x2] sm:$0x3]
    %v81 = vld [vmem:[#allocation4 + $0x4] sm:$0x3]
    %v82 = vld [vmem:[#allocation4 + $0x6] sm:$0x3]
    %v83 = vld [vmem:[#allocation4 + $0x8] sm:$0x3]
    %v84 = vld [vmem:[#allocation4 + $0xa] sm:$0x3]
    %v85 = vld [vmem:[#allocation4 + $0xc] sm:$0x3]
    %v86 = vld [vmem:[#allocation4 + $0xe] sm:$0x3]
    %v87 = vlaneseq
    %v88 = vshrl.u32 %v87, 7
    %v89 = vsub.s32 0, %v88
    %v90 = vrot.slane %v77, %v89
    %v99 = vcombine.low %v79, %v80
    %v100 = vcombine.low %v81, %v82
    %v102 = vunpack.c.l.s4 1983009808
    %v103 = vunpack.c.0.s8 %v102
    %v104 = vlaneseq
    %v105 = vshrl.u32 %v104, 7
    %v106 = vsub.s32 %v103, %v105
    %v107 = vrot.slane %v99, %v106
    %v109 = vunpack.c.l.s4 1983009808
    %v110 = vunpack.c.0.s8 %v109
    %v111 = vlaneseq
    %v112 = vshrl.u32 %v111, 7
    %v113 = vsub.s32 %v110, %v112
    %v114 = vrot.slane %v100, %v113
    %v115 = vcombine.low %v107, %v114
    %v116 = vcombine.low %v83, %v84
    %v117 = vcombine.low %v85, %v86
    %v119 = vunpack.c.l.s4 1983009808
    %v120 = vunpack.c.0.s8 %v119
    %v121 = vlaneseq
    %v122 = vshrl.u32 %v121, 7
    %v123 = vsub.s32 %v120, %v122
    %v124 = vrot.slane %v116, %v123
    %v126 = vunpack.c.l.s4 1983009808
    %v127 = vunpack.c.0.s8 %v126
    %v128 = vlaneseq
    %v129 = vshrl.u32 %v128, 7
    %v130 = vsub.s32 %v127, %v129
    %v131 = vrot.slane %v117, %v130
    %v132 = vcombine.low %v124, %v131
    %vm133 = vcmask 130048
    %v134 = vsel %vm133, %v115, 0
    %v136 = vsel %vm133, %v132, 0
    %138 = vmatprep.subr.mxu0 0.0
    %139 = vmatpush1.msra.mxu0 0.0
    %140 = vmatprep.subr.mxu0 0.0
    %141 = vmatpush1.msra.mxu0 0.0
    %142 = vmatprep.subr.mxu0 0.0
    %143 = vmatpush1.msra.mxu0 0.0
    %144 = vmatprep.subr.mxu0 0.0
    %145 = vmatpush1.msra.mxu0 0.0
    %146 = vmatprep.subr.mxu0 0.0
    %147 = vmatpush1.msra.mxu0 0.0
    %148 = vmatprep.subr.mxu0 0.0
    %149 = vmatpush1.msra.mxu0 0.0
    %150 = vmatprep.subr.mxu0 0.0
    %151 = vmatpush1.msra.mxu0 0.0
    %152 = vmatprep.subr.mxu0 0.0
    %153 = vmatpush1.msra.mxu0 0.0
    %154 = vmatprep.subr.mxu0 0.0
    %155 = vmatpush1.msra.mxu0 0.0
    %156 = vmatprep.subr.mxu0 0.0
    %157 = vmatpush1.msra.mxu0 0.0
    %158 = vmatprep.subr.mxu0 0.0
    %159 = vmatpush1.msra.mxu0 0.0
    %160 = vmatprep.subr.mxu0 0.0
    %161 = vmatpush1.msra.mxu0 0.0
    %162 = vmatprep.subr.mxu0 0.0
    %163 = vmatpush1.msra.mxu0 0.0
    %164 = vmatprep.subr.mxu0 0.0
    %165 = vmatpush1.msra.mxu0 0.0
    %166 = vmatprep.subr.mxu0 0.0
    %167 = vmatpush1.msra.mxu0 %v74
    %168 = vmatprep.subr.mxu0 0.0
    %169 = vmatpush1.msra.mxu0 %v73
    %170 = vmatprep.subr.mxu0 0.0
    %171 = vmatpush2.msra.mxu0 0.0
    %172 = vmatprep.subr.mxu0 0.0
    %173 = vmatpush2.msra.mxu0 0.0
    %174 = vmatprep.subr.mxu0 0.0
    %175 = vmatpush2.msra.mxu0 0.0
    %176 = vmatprep.subr.mxu0 0.0
    %177 = vmatpush2.msra.mxu0 0.0
    %178 = vmatprep.subr.mxu0 0.0
    %179 = vmatpush2.msra.mxu0 0.0
    %180 = vmatprep.subr.mxu0 0.0
    %181 = vmatpush2.msra.mxu0 0.0
    %182 = vmatprep.subr.mxu0 0.0
    %183 = vmatpush2.msra.mxu0 0.0
    %184 = vmatprep.subr.mxu0 0.0
    %185 = vmatpush2.msra.mxu0 0.0
    %186 = vmatprep.subr.mxu0 0.0
    %187 = vmatpush2.msra.mxu0 0.0
    %188 = vmatprep.subr.mxu0 0.0
    %189 = vmatpush2.msra.mxu0 0.0
    %190 = vmatprep.subr.mxu0 0.0
    %191 = vmatpush2.msra.mxu0 0.0
    %192 = vmatprep.subr.mxu0 0.0
    %193 = vmatpush2.msra.mxu0 0.0
    %194 = vmatprep.subr.mxu0 0.0
    %195 = vmatpush2.msra.mxu0 0.0
    %196 = vmatprep.subr.mxu0 0.0
    %197 = vmatpush2.msra.mxu0 0.0
    %198 = vmatprep.subr.mxu0 0.0
    %199 = vmatpush2.msra.mxu0 0.0
    %200 = vmatprep.subr.mxu0 0.0
    %201 = vmatpush2.msra.mxu0 0.0
    %202 = vmatprep.mubr.f32.mxu0 0.0
    %203 = vmatmul.mubr.f32.gmra.mxu0 %v134
    %v204 = vpop.f32.mrf.mxu0
    %v205 = vadd.f32 %v90, %v204
    %v206 = vpop.f32.mrf.mxu0
    %207 = vmatprep.mubr.f32.mxu0 0.0
    %208 = vmatmul.mubr.f32.gmra.mxu0 %v136
    %v209 = vpop.f32.mrf.mxu0
    %v210 = vadd.f32 %v90, %v209
    %v211 = vpop.f32.mrf.mxu0
    %212 = vdwg.mxu0
    %v215 = vcombine.high %v205, %v205
    %v217 = vunpack.c.l.s4 1983009808
    %v218 = vunpack.c.0.s8 %v217
    %v219 = vlaneseq
    %v220 = vshrl.u32 %v219, 7
    %v221 = vsub.s32 %v218, %v220
    %v222 = vrot.slane %v205, %v221
    %v224 = vunpack.c.l.s4 1983009808
    %v225 = vunpack.c.0.s8 %v224
    %v226 = vlaneseq
    %v227 = vshrl.u32 %v226, 7
    %v228 = vsub.s32 %v225, %v227
    %v229 = vrot.slane %v215, %v228
    %v230 = vcombine.high %v222, %v222
    %v231 = vcombine.high %v229, %v229
    %v232 = vcombine.high %v210, %v210
    %v234 = vunpack.c.l.s4 1983009808
    %v235 = vunpack.c.0.s8 %v234
    %v236 = vlaneseq
    %v237 = vshrl.u32 %v236, 7
    %v238 = vsub.s32 %v235, %v237
    %v239 = vrot.slane %v210, %v238
    %v241 = vunpack.c.l.s4 1983009808
    %v242 = vunpack.c.0.s8 %v241
    %v243 = vlaneseq
    %v244 = vshrl.u32 %v243, 7
    %v245 = vsub.s32 %v242, %v244
    %v246 = vrot.slane %v232, %v245
    %v247 = vcombine.high %v239, %v239
    %v248 = vcombine.high %v246, %v246
    %vm257 = vcmask 238592
    %258 = vst.msk [vmem:[#allocation2] sm:$0x3] %vm257, %v222
    %259 = vst.msk [vmem:[#allocation2 + $0x2] sm:$0x3] %vm257, %v230
    %260 = vst.msk [vmem:[#allocation2 + $0x4] sm:$0x3] %vm257, %v229
    %261 = vst.msk [vmem:[#allocation2 + $0x6] sm:$0x3] %vm257, %v231
    %262 = vst.msk [vmem:[#allocation2 + $0x8] sm:$0x3] %vm257, %v239
    %263 = vst.msk [vmem:[#allocation2 + $0xa] sm:$0x3] %vm257, %v247
    %264 = vst.msk [vmem:[#allocation2 + $0xc] sm:$0x3] %vm257, %v246
    %265 = vst.msk [vmem:[#allocation2 + $0xe] sm:$0x3] %vm257, %v248
    %v266 = vld [vmem:[#allocation7] sm:$0x3]
    %v267 = vld [vmem:[#allocation2] sm:$0x3]
    %vm268 = vcmask 80896
    %v270 = vsel %vm268, %v266, 0
    %vm272 = vcmask 1041408
    %v274 = vsel %vm272, %v76, 0
    %276 = vmatprep.subr.mxu0 0.0
    %277 = vmatpush1.msra.mxu0 0.0
    %278 = vmatprep.subr.mxu0 0.0
    %279 = vmatpush1.msra.mxu0 0.0
    %280 = vmatprep.subr.mxu0 0.0
    %281 = vmatpush1.msra.mxu0 0.0
    %282 = vmatprep.subr.mxu0 0.0
    %283 = vmatpush1.msra.mxu0 0.0
    %284 = vmatprep.subr.mxu0 0.0
    %285 = vmatpush1.msra.mxu0 0.0
    %286 = vmatprep.subr.mxu0 0.0
    %287 = vmatpush1.msra.mxu0 0.0
    %288 = vmatprep.subr.mxu0 0.0
    %289 = vmatpush1.msra.mxu0 0.0
    %290 = vmatprep.subr.mxu0 0.0
    %291 = vmatpush1.msra.mxu0 0.0
    %292 = vmatprep.subr.mxu0 0.0
    %293 = vmatpush1.msra.mxu0 0.0
    %294 = vmatprep.subr.mxu0 0.0
    %295 = vmatpush1.msra.mxu0 0.0
    %296 = vmatprep.subr.mxu0 0.0
    %297 = vmatpush1.msra.mxu0 0.0
    %298 = vmatprep.subr.mxu0 0.0
    %299 = vmatpush1.msra.mxu0 0.0
    %300 = vmatprep.subr.mxu0 0.0
    %301 = vmatpush1.msra.mxu0 0.0
    %302 = vmatprep.subr.mxu0 0.0
    %303 = vmatpush1.msra.mxu0 0.0
    %304 = vmatprep.subr.mxu0 0.0
    %305 = vmatpush1.msra.mxu0 %v274
    %306 = vmatprep.subr.mxu0 0.0
    %307 = vmatpush1.msra.mxu0 %v75
    %308 = vmatprep.subr.mxu0 0.0
    %309 = vmatpush2.msra.mxu0 0.0
    %310 = vmatprep.subr.mxu0 0.0
    %311 = vmatpush2.msra.mxu0 0.0
    %312 = vmatprep.subr.mxu0 0.0
    %313 = vmatpush2.msra.mxu0 0.0
    %314 = vmatprep.subr.mxu0 0.0
    %315 = vmatpush2.msra.mxu0 0.0
    %316 = vmatprep.subr.mxu0 0.0
    %317 = vmatpush2.msra.mxu0 0.0
    %318 = vmatprep.subr.mxu0 0.0
    %319 = vmatpush2.msra.mxu0 0.0
    %320 = vmatprep.subr.mxu0 0.0
    %321 = vmatpush2.msra.mxu0 0.0
    %322 = vmatprep.subr.mxu0 0.0
    %323 = vmatpush2.msra.mxu0 0.0
    %324 = vmatprep.subr.mxu0 0.0
    %325 = vmatpush2.msra.mxu0 0.0
    %326 = vmatprep.subr.mxu0 0.0
    %327 = vmatpush2.msra.mxu0 0.0
    %328 = vmatprep.subr.mxu0 0.0
    %329 = vmatpush2.msra.mxu0 0.0
    %330 = vmatprep.subr.mxu0 0.0
    %331 = vmatpush2.msra.mxu0 0.0
    %332 = vmatprep.subr.mxu0 0.0
    %333 = vmatpush2.msra.mxu0 0.0
    %334 = vmatprep.subr.mxu0 0.0
    %335 = vmatpush2.msra.mxu0 0.0
    %336 = vmatprep.subr.mxu0 0.0
    %337 = vmatpush2.msra.mxu0 0.0
    %338 = vmatprep.subr.mxu0 0.0
    %339 = vmatpush2.msra.mxu0 0.0
    %340 = vmatprep.mubr.f32.mxu0 0.0
    %341 = vmatmul.mubr.f32.gmra.mxu0 %v270
    %v342 = vpop.f32.mrf.mxu0
    %v343 = vadd.f32 0.0, %v342
    %v344 = vpop.f32.mrf.mxu0
    %345 = vdwg.mxu0
    %v346 = vadd.f32 %v267, %v343
    %v347 = vxor.u32 %v346, 2147483648
    %v348 = vmul.f32 %v347, 1.442695
    %v349 = vpow.pop %v348
    %v350 = vadd.f32 %v349, 1.0
    %v351 = vrcp.pop %v350
    %v352 = vmul.f32 1.0, %v351
    %v353 = vlaneseq
    %v354 = vshrl.u32 %v353, 7
    %v355 = vsub.s32 0, %v354
    %v356 = vrot.slane %v78, %v355
    %v357 = vadd.f32 %v343, %v356
    %359 = vrot.lane.b32.xlu0 %v357, 108
    %v360 = vpop.permute.xlu0 %359
    %v362 = vmul.f32 %v352, %v360
    %364 = vrot.lane.b32.xlu0 %v362, 20
    %v365 = vpop.permute.xlu0 %364
    %v367 = vadd.f32 %v267, %v365
    %v368 = vtanh.pop %v367
    %v369 = vsub.f32 1.0, %v352
    %371 = vrot.lane.b32.xlu0 %v368, 118
    %v372 = vpop.permute.xlu0 %371
    %v374 = vmul.f32 %v369, %v372
    %375 = vrot.lane.b32.xlu0 %v266, 10
    %v376 = vpop.permute.xlu0 %375
    %v378 = vmul.f32 %v352, %v376
    %v379 = vadd.f32 %v374, %v378
    %381 = vrot.lane.b32.xlu0 %v379, 118
    %v382 = vpop.permute.xlu0 %381
    %vm384 = vcmask 74752
    %385 = vst.msk [vmem:[#allocation3] sm:$0x3] %vm384, %v382
    %s386 = scalar_lea.vmem [#allocation2], 2
    %v387 = vld [vmem:[%s386] sm:$0x3]
    %v388 = vsel %vm268, %v382, 0
    %390 = vmatprep.subr.mxu0 0.0
    %391 = vmatpush1.msra.mxu0 0.0
    %392 = vmatprep.subr.mxu0 0.0
    %393 = vmatpush1.msra.mxu0 0.0
    %394 = vmatprep.subr.mxu0 0.0
    %395 = vmatpush1.msra.mxu0 0.0
    %396 = vmatprep.subr.mxu0 0.0
    %397 = vmatpush1.msra.mxu0 0.0
    %398 = vmatprep.subr.mxu0 0.0
    %399 = vmatpush1.msra.mxu0 0.0
    %400 = vmatprep.subr.mxu0 0.0
    %401 = vmatpush1.msra.mxu0 0.0
    %402 = vmatprep.subr.mxu0 0.0
    %403 = vmatpush1.msra.mxu0 0.0
    %404 = vmatprep.subr.mxu0 0.0
    %405 = vmatpush1.msra.mxu0 0.0
    %406 = vmatprep.subr.mxu0 0.0
    %407 = vmatpush1.msra.mxu0 0.0
    %408 = vmatprep.subr.mxu0 0.0
    %409 = vmatpush1.msra.mxu0 0.0
    %410 = vmatprep.subr.mxu0 0.0
    %411 = vmatpush1.msra.mxu0 0.0
    %412 = vmatprep.subr.mxu0 0.0
    %413 = vmatpush1.msra.mxu0 0.0
    %414 = vmatprep.subr.mxu0 0.0
    %415 = vmatpush1.msra.mxu0 0.0
    %416 = vmatprep.subr.mxu0 0.0
    %417 = vmatpush1.msra.mxu0 0.0
    %418 = vmatprep.subr.mxu0 0.0
    %419 = vmatpush1.msra.mxu0 %v274
    %420 = vmatprep.subr.mxu0 0.0
    %421 = vmatpush1.msra.mxu0 %v75
    %422 = vmatprep.subr.mxu0 0.0
    %423 = vmatpush2.msra.mxu0 0.0
    %424 = vmatprep.subr.mxu0 0.0
    %425 = vmatpush2.msra.mxu0 0.0
    %426 = vmatprep.subr.mxu0 0.0
    %427 = vmatpush2.msra.mxu0 0.0
    %428 = vmatprep.subr.mxu0 0.0
    %429 = vmatpush2.msra.mxu0 0.0
    %430 = vmatprep.subr.mxu0 0.0
    %431 = vmatpush2.msra.mxu0 0.0
    %432 = vmatprep.subr.mxu0 0.0
    %433 = vmatpush2.msra.mxu0 0.0
    %434 = vmatprep.subr.mxu0 0.0
    %435 = vmatpush2.msra.mxu0 0.0
    %436 = vmatprep.subr.mxu0 0.0
    %437 = vmatpush2.msra.mxu0 0.0
    %438 = vmatprep.subr.mxu0 0.0
    %439 = vmatpush2.msra.mxu0 0.0
    %440 = vmatprep.subr.mxu0 0.0
    %441 = vmatpush2.msra.mxu0 0.0
    %442 = vmatprep.subr.mxu0 0.0
    %443 = vmatpush2.msra.mxu0 0.0
    %444 = vmatprep.subr.mxu0 0.0
    %445 = vmatpush2.msra.mxu0 0.0
    %446 = vmatprep.subr.mxu0 0.0
    %447 = vmatpush2.msra.mxu0 0.0
    %448 = vmatprep.subr.mxu0 0.0
    %449 = vmatpush2.msra.mxu0 0.0
    %450 = vmatprep.subr.mxu0 0.0
    %451 = vmatpush2.msra.mxu0 0.0
    %452 = vmatprep.subr.mxu0 0.0
    %453 = vmatpush2.msra.mxu0 0.0
    %454 = vmatprep.mubr.f32.mxu0 0.0
    %455 = vmatmul.mubr.f32.gmra.mxu0 %v388
    %v456 = vpop.f32.mrf.mxu0
    %v457 = vadd.f32 0.0, %v456
    %v458 = vpop.f32.mrf.mxu0
    %459 = vdwg.mxu0
    %v460 = vadd.f32 %v387, %v457
    %v461 = vxor.u32 %v460, 2147483648
    %v462 = vmul.f32 %v461, 1.442695
    %v463 = vpow.pop %v462
    %v464 = vadd.f32 %v463, 1.0
    %v465 = vrcp.pop %v464
    %v466 = vmul.f32 1.0, %v465
    %v467 = vadd.f32 %v457, %v356
    %469 = vrot.lane.b32.xlu0 %v467, 108
    %v470 = vpop.permute.xlu0 %469
    %v472 = vmul.f32 %v466, %v470
    %474 = vrot.lane.b32.xlu0 %v472, 20
    %v475 = vpop.permute.xlu0 %474
    %v477 = vadd.f32 %v387, %v475
    %v478 = vtanh.pop %v477
    %v479 = vsub.f32 1.0, %v466
    %481 = vrot.lane.b32.xlu0 %v478, 118
    %v482 = vpop.permute.xlu0 %481
    %v484 = vmul.f32 %v479, %v482
    %v485 = vmul.f32 %v466, %v379
    %v486 = vadd.f32 %v484, %v485
    %488 = vrot.lane.b32.xlu0 %v486, 118
    %v489 = vpop.permute.xlu0 %488
    %s491 = scalar_lea.vmem [#allocation3], 2
    %492 = vst.msk [vmem:[%s491] sm:$0x3] %vm384, %v489
    %s493 = scalar_lea.vmem [#allocation2], 4
    %v494 = vld [vmem:[%s493] sm:$0x3]
    %v495 = vsel %vm268, %v489, 0
    %497 = vmatprep.subr.mxu0 0.0
    %498 = vmatpush1.msra.mxu0 0.0
    %499 = vmatprep.subr.mxu0 0.0
    %500 = vmatpush1.msra.mxu0 0.0
    %501 = vmatprep.subr.mxu0 0.0
    %502 = vmatpush1.msra.mxu0 0.0
    %503 = vmatprep.subr.mxu0 0.0
    %504 = vmatpush1.msra.mxu0 0.0
    %505 = vmatprep.subr.mxu0 0.0
    %506 = vmatpush1.msra.mxu0 0.0
    %507 = vmatprep.subr.mxu0 0.0
    %508 = vmatpush1.msra.mxu0 0.0
    %509 = vmatprep.subr.mxu0 0.0
    %510 = vmatpush1.msra.mxu0 0.0
    %511 = vmatprep.subr.mxu0 0.0
    %512 = vmatpush1.msra.mxu0 0.0
    %513 = vmatprep.subr.mxu0 0.0
    %514 = vmatpush1.msra.mxu0 0.0
    %515 = vmatprep.subr.mxu0 0.0
    %516 = vmatpush1.msra.mxu0 0.0
    %517 = vmatprep.subr.mxu0 0.0
    %518 = vmatpush1.msra.mxu0 0.0
    %519 = vmatprep.subr.mxu0 0.0
    %520 = vmatpush1.msra.mxu0 0.0
    %521 = vmatprep.subr.mxu0 0.0
    %522 = vmatpush1.msra.mxu0 0.0
    %523 = vmatprep.subr.mxu0 0.0
    %524 = vmatpush1.msra.mxu0 0.0
    %525 = vmatprep.subr.mxu0 0.0
    %526 = vmatpush1.msra.mxu0 %v274
    %527 = vmatprep.subr.mxu0 0.0
    %528 = vmatpush1.msra.mxu0 %v75
    %529 = vmatprep.subr.mxu0 0.0
    %530 = vmatpush2.msra.mxu0 0.0
    %531 = vmatprep.subr.mxu0 0.0
    %532 = vmatpush2.msra.mxu0 0.0
    %533 = vmatprep.subr.mxu0 0.0
    %534 = vmatpush2.msra.mxu0 0.0
    %535 = vmatprep.subr.mxu0 0.0
    %536 = vmatpush2.msra.mxu0 0.0
    %537 = vmatprep.subr.mxu0 0.0
    %538 = vmatpush2.msra.mxu0 0.0
    %539 = vmatprep.subr.mxu0 0.0
    %540 = vmatpush2.msra.mxu0 0.0
    %541 = vmatprep.subr.mxu0 0.0
    %542 = vmatpush2.msra.mxu0 0.0
    %543 = vmatprep.subr.mxu0 0.0
    %544 = vmatpush2.msra.mxu0 0.0
    %545 = vmatprep.subr.mxu0 0.0
    %546 = vmatpush2.msra.mxu0 0.0
    %547 = vmatprep.subr.mxu0 0.0
    %548 = vmatpush2.msra.mxu0 0.0
    %549 = vmatprep.subr.mxu0 0.0
    %550 = vmatpush2.msra.mxu0 0.0
    %551 = vmatprep.subr.mxu0 0.0
    %552 = vmatpush2.msra.mxu0 0.0
    %553 = vmatprep.subr.mxu0 0.0
    %554 = vmatpush2.msra.mxu0 0.0
    %555 = vmatprep.subr.mxu0 0.0
    %556 = vmatpush2.msra.mxu0 0.0
    %557 = vmatprep.subr.mxu0 0.0
    %558 = vmatpush2.msra.mxu0 0.0
    %559 = vmatprep.subr.mxu0 0.0
    %560 = vmatpush2.msra.mxu0 0.0
    %561 = vmatprep.mubr.f32.mxu0 0.0
    %562 = vmatmul.mubr.f32.gmra.mxu0 %v495
    %v563 = vpop.f32.mrf.mxu0
    %v564 = vadd.f32 0.0, %v563
    %v565 = vpop.f32.mrf.mxu0
    %566 = vdwg.mxu0
    %v567 = vadd.f32 %v494, %v564
    %v568 = vxor.u32 %v567, 2147483648
    %v569 = vmul.f32 %v568, 1.442695
    %v570 = vpow.pop %v569
    %v571 = vadd.f32 %v570, 1.0
    %v572 = vrcp.pop %v571
    %v573 = vmul.f32 1.0, %v572
    %v574 = vadd.f32 %v564, %v356
    %576 = vrot.lane.b32.xlu0 %v574, 108
    %v577 = vpop.permute.xlu0 %576
    %v579 = vmul.f32 %v573, %v577
    %581 = vrot.lane.b32.xlu0 %v579, 20
    %v582 = vpop.permute.xlu0 %581
    %v584 = vadd.f32 %v494, %v582
    %v585 = vtanh.pop %v584
    %v586 = vsub.f32 1.0, %v573
    %588 = vrot.lane.b32.xlu0 %v585, 118
    %v589 = vpop.permute.xlu0 %588
    %v591 = vmul.f32 %v586, %v589
    %v592 = vmul.f32 %v573, %v486
    %v593 = vadd.f32 %v591, %v592
    %595 = vrot.lane.b32.xlu0 %v593, 118
    %v596 = vpop.permute.xlu0 %595
    %s598 = scalar_lea.vmem [#allocation3], 4
    %599 = vst.msk [vmem:[%s598] sm:$0x3] %vm384, %v596
    %s600 = scalar_lea.vmem [#allocation2], 6
    %v601 = vld [vmem:[%s600] sm:$0x3]
    %v602 = vsel %vm268, %v596, 0
    %604 = vmatprep.subr.mxu0 0.0
    %605 = vmatpush1.msra.mxu0 0.0
    %606 = vmatprep.subr.mxu0 0.0
    %607 = vmatpush1.msra.mxu0 0.0
    %608 = vmatprep.subr.mxu0 0.0
    %609 = vmatpush1.msra.mxu0 0.0
    %610 = vmatprep.subr.mxu0 0.0
    %611 = vmatpush1.msra.mxu0 0.0
    %612 = vmatprep.subr.mxu0 0.0
    %613 = vmatpush1.msra.mxu0 0.0
    %614 = vmatprep.subr.mxu0 0.0
    %615 = vmatpush1.msra.mxu0 0.0
    %616 = vmatprep.subr.mxu0 0.0
    %617 = vmatpush1.msra.mxu0 0.0
    %618 = vmatprep.subr.mxu0 0.0
    %619 = vmatpush1.msra.mxu0 0.0
    %620 = vmatprep.subr.mxu0 0.0
    %621 = vmatpush1.msra.mxu0 0.0
    %622 = vmatprep.subr.mxu0 0.0
    %623 = vmatpush1.msra.mxu0 0.0
    %624 = vmatprep.subr.mxu0 0.0
    %625 = vmatpush1.msra.mxu0 0.0
    %626 = vmatprep.subr.mxu0 0.0
    %627 = vmatpush1.msra.mxu0 0.0
    %628 = vmatprep.subr.mxu0 0.0
    %629 = vmatpush1.msra.mxu0 0.0
    %630 = vmatprep.subr.mxu0 0.0
    %631 = vmatpush1.msra.mxu0 0.0
    %632 = vmatprep.subr.mxu0 0.0
    %633 = vmatpush1.msra.mxu0 %v274
    %634 = vmatprep.subr.mxu0 0.0
    %635 = vmatpush1.msra.mxu0 %v75
    %636 = vmatprep.subr.mxu0 0.0
    %637 = vmatpush2.msra.mxu0 0.0
    %638 = vmatprep.subr.mxu0 0.0
    %639 = vmatpush2.msra.mxu0 0.0
    %640 = vmatprep.subr.mxu0 0.0
    %641 = vmatpush2.msra.mxu0 0.0
    %642 = vmatprep.subr.mxu0 0.0
    %643 = vmatpush2.msra.mxu0 0.0
    %644 = vmatprep.subr.mxu0 0.0
    %645 = vmatpush2.msra.mxu0 0.0
    %646 = vmatprep.subr.mxu0 0.0
    %647 = vmatpush2.msra.mxu0 0.0
    %648 = vmatprep.subr.mxu0 0.0
    %649 = vmatpush2.msra.mxu0 0.0
    %650 = vmatprep.subr.mxu0 0.0
    %651 = vmatpush2.msra.mxu0 0.0
    %652 = vmatprep.subr.mxu0 0.0
    %653 = vmatpush2.msra.mxu0 0.0
    %654 = vmatprep.subr.mxu0 0.0
    %655 = vmatpush2.msra.mxu0 0.0
    %656 = vmatprep.subr.mxu0 0.0
    %657 = vmatpush2.msra.mxu0 0.0
    %658 = vmatprep.subr.mxu0 0.0
    %659 = vmatpush2.msra.mxu0 0.0
    %660 = vmatprep.subr.mxu0 0.0
    %661 = vmatpush2.msra.mxu0 0.0
    %662 = vmatprep.subr.mxu0 0.0
    %663 = vmatpush2.msra.mxu0 0.0
    %664 = vmatprep.subr.mxu0 0.0
    %665 = vmatpush2.msra.mxu0 0.0
    %666 = vmatprep.subr.mxu0 0.0
    %667 = vmatpush2.msra.mxu0 0.0
    %668 = vmatprep.mubr.f32.mxu0 0.0
    %669 = vmatmul.mubr.f32.gmra.mxu0 %v602
    %v670 = vpop.f32.mrf.mxu0
    %v671 = vadd.f32 0.0, %v670
    %v672 = vpop.f32.mrf.mxu0
    %673 = vdwg.mxu0
    %v674 = vadd.f32 %v601, %v671
    %v675 = vxor.u32 %v674, 2147483648
    %v676 = vmul.f32 %v675, 1.442695
    %v677 = vpow.pop %v676
    %v678 = vadd.f32 %v677, 1.0
    %v679 = vrcp.pop %v678
    %v680 = vmul.f32 1.0, %v679
    %v681 = vadd.f32 %v671, %v356
    %683 = vrot.lane.b32.xlu0 %v681, 108
    %v684 = vpop.permute.xlu0 %683
    %v686 = vmul.f32 %v680, %v684
    %688 = vrot.lane.b32.xlu0 %v686, 20
    %v689 = vpop.permute.xlu0 %688
    %v691 = vadd.f32 %v601, %v689
    %v692 = vtanh.pop %v691
    %v693 = vsub.f32 1.0, %v680
    %695 = vrot.lane.b32.xlu0 %v692, 118
    %v696 = vpop.permute.xlu0 %695
    %v698 = vmul.f32 %v693, %v696
    %v699 = vmul.f32 %v680, %v593
    %v700 = vadd.f32 %v698, %v699
    %702 = vrot.lane.b32.xlu0 %v700, 118
    %v703 = vpop.permute.xlu0 %702
    %s705 = scalar_lea.vmem [#allocation3], 6
    %706 = vst.msk [vmem:[%s705] sm:$0x3] %vm384, %v703
    %s707 = scalar_lea.vmem [#allocation2], 8
    %v708 = vld [vmem:[%s707] sm:$0x3]
    %v709 = vsel %vm268, %v703, 0
    %711 = vmatprep.subr.mxu0 0.0
    %712 = vmatpush1.msra.mxu0 0.0
    %713 = vmatprep.subr.mxu0 0.0
    %714 = vmatpush1.msra.mxu0 0.0
    %715 = vmatprep.subr.mxu0 0.0
    %716 = vmatpush1.msra.mxu0 0.0
    %717 = vmatprep.subr.mxu0 0.0
    %718 = vmatpush1.msra.mxu0 0.0
    %719 = vmatprep.subr.mxu0 0.0
    %720 = vmatpush1.msra.mxu0 0.0
    %721 = vmatprep.subr.mxu0 0.0
    %722 = vmatpush1.msra.mxu0 0.0
    %723 = vmatprep.subr.mxu0 0.0
    %724 = vmatpush1.msra.mxu0 0.0
    %725 = vmatprep.subr.mxu0 0.0
    %726 = vmatpush1.msra.mxu0 0.0
    %727 = vmatprep.subr.mxu0 0.0
    %728 = vmatpush1.msra.mxu0 0.0
    %729 = vmatprep.subr.mxu0 0.0
    %730 = vmatpush1.msra.mxu0 0.0
    %731 = vmatprep.subr.mxu0 0.0
    %732 = vmatpush1.msra.mxu0 0.0
    %733 = vmatprep.subr.mxu0 0.0
    %734 = vmatpush1.msra.mxu0 0.0
    %735 = vmatprep.subr.mxu0 0.0
    %736 = vmatpush1.msra.mxu0 0.0
    %737 = vmatprep.subr.mxu0 0.0
    %738 = vmatpush1.msra.mxu0 0.0
    %739 = vmatprep.subr.mxu0 0.0
    %740 = vmatpush1.msra.mxu0 %v274
    %741 = vmatprep.subr.mxu0 0.0
    %742 = vmatpush1.msra.mxu0 %v75
    %743 = vmatprep.subr.mxu0 0.0
    %744 = vmatpush2.msra.mxu0 0.0
    %745 = vmatprep.subr.mxu0 0.0
    %746 = vmatpush2.msra.mxu0 0.0
    %747 = vmatprep.subr.mxu0 0.0
    %748 = vmatpush2.msra.mxu0 0.0
    %749 = vmatprep.subr.mxu0 0.0
    %750 = vmatpush2.msra.mxu0 0.0
    %751 = vmatprep.subr.mxu0 0.0
    %752 = vmatpush2.msra.mxu0 0.0
    %753 = vmatprep.subr.mxu0 0.0
    %754 = vmatpush2.msra.mxu0 0.0
    %755 = vmatprep.subr.mxu0 0.0
    %756 = vmatpush2.msra.mxu0 0.0
    %757 = vmatprep.subr.mxu0 0.0
    %758 = vmatpush2.msra.mxu0 0.0
    %759 = vmatprep.subr.mxu0 0.0
    %760 = vmatpush2.msra.mxu0 0.0
    %761 = vmatprep.subr.mxu0 0.0
    %762 = vmatpush2.msra.mxu0 0.0
    %763 = vmatprep.subr.mxu0 0.0
    %764 = vmatpush2.msra.mxu0 0.0
    %765 = vmatprep.subr.mxu0 0.0
    %766 = vmatpush2.msra.mxu0 0.0
    %767 = vmatprep.subr.mxu0 0.0
    %768 = vmatpush2.msra.mxu0 0.0
    %769 = vmatprep.subr.mxu0 0.0
    %770 = vmatpush2.msra.mxu0 0.0
    %771 = vmatprep.subr.mxu0 0.0
    %772 = vmatpush2.msra.mxu0 0.0
    %773 = vmatprep.subr.mxu0 0.0
    %774 = vmatpush2.msra.mxu0 0.0
    %775 = vmatprep.mubr.f32.mxu0 0.0
    %776 = vmatmul.mubr.f32.gmra.mxu0 %v709
    %v777 = vpop.f32.mrf.mxu0
    %v778 = vadd.f32 0.0, %v777
    %v779 = vpop.f32.mrf.mxu0
    %780 = vdwg.mxu0
    %v781 = vadd.f32 %v708, %v778
    %v782 = vxor.u32 %v781, 2147483648
    %v783 = vmul.f32 %v782, 1.442695
    %v784 = vpow.pop %v783
    %v785 = vadd.f32 %v784, 1.0
    %v786 = vrcp.pop %v785
    %v787 = vmul.f32 1.0, %v786
    %v788 = vadd.f32 %v778, %v356
    %790 = vrot.lane.b32.xlu0 %v788, 108
    %v791 = vpop.permute.xlu0 %790
    %v793 = vmul.f32 %v787, %v791
    %795 = vrot.lane.b32.xlu0 %v793, 20
    %v796 = vpop.permute.xlu0 %795
    %v798 = vadd.f32 %v708, %v796
    %v799 = vtanh.pop %v798
    %v800 = vsub.f32 1.0, %v787
    %802 = vrot.lane.b32.xlu0 %v799, 118
    %v803 = vpop.permute.xlu0 %802
    %v805 = vmul.f32 %v800, %v803
    %v806 = vmul.f32 %v787, %v700
    %v807 = vadd.f32 %v805, %v806
    %809 = vrot.lane.b32.xlu0 %v807, 118
    %v810 = vpop.permute.xlu0 %809
    %s812 = scalar_lea.vmem [#allocation3], 8
    %813 = vst.msk [vmem:[%s812] sm:$0x3] %vm384, %v810
    %s814 = scalar_lea.vmem [#allocation2], 10
    %v815 = vld [vmem:[%s814] sm:$0x3]
    %v816 = vsel %vm268, %v810, 0
    %818 = vmatprep.subr.mxu0 0.0
    %819 = vmatpush1.msra.mxu0 0.0
    %820 = vmatprep.subr.mxu0 0.0
    %821 = vmatpush1.msra.mxu0 0.0
    %822 = vmatprep.subr.mxu0 0.0
    %823 = vmatpush1.msra.mxu0 0.0
    %824 = vmatprep.subr.mxu0 0.0
    %825 = vmatpush1.msra.mxu0 0.0
    %826 = vmatprep.subr.mxu0 0.0
    %827 = vmatpush1.msra.mxu0 0.0
    %828 = vmatprep.subr.mxu0 0.0
    %829 = vmatpush1.msra.mxu0 0.0
    %830 = vmatprep.subr.mxu0 0.0
    %831 = vmatpush1.msra.mxu0 0.0
    %832 = vmatprep.subr.mxu0 0.0
    %833 = vmatpush1.msra.mxu0 0.0
    %834 = vmatprep.subr.mxu0 0.0
    %835 = vmatpush1.msra.mxu0 0.0
    %836 = vmatprep.subr.mxu0 0.0
    %837 = vmatpush1.msra.mxu0 0.0
    %838 = vmatprep.subr.mxu0 0.0
    %839 = vmatpush1.msra.mxu0 0.0
    %840 = vmatprep.subr.mxu0 0.0
    %841 = vmatpush1.msra.mxu0 0.0
    %842 = vmatprep.subr.mxu0 0.0
    %843 = vmatpush1.msra.mxu0 0.0
    %844 = vmatprep.subr.mxu0 0.0
    %845 = vmatpush1.msra.mxu0 0.0
    %846 = vmatprep.subr.mxu0 0.0
    %847 = vmatpush1.msra.mxu0 %v274
    %848 = vmatprep.subr.mxu0 0.0
    %849 = vmatpush1.msra.mxu0 %v75
    %850 = vmatprep.subr.mxu0 0.0
    %851 = vmatpush2.msra.mxu0 0.0
    %852 = vmatprep.subr.mxu0 0.0
    %853 = vmatpush2.msra.mxu0 0.0
    %854 = vmatprep.subr.mxu0 0.0
    %855 = vmatpush2.msra.mxu0 0.0
    %856 = vmatprep.subr.mxu0 0.0
    %857 = vmatpush2.msra.mxu0 0.0
    %858 = vmatprep.subr.mxu0 0.0
    %859 = vmatpush2.msra.mxu0 0.0
    %860 = vmatprep.subr.mxu0 0.0
    %861 = vmatpush2.msra.mxu0 0.0
    %862 = vmatprep.subr.mxu0 0.0
    %863 = vmatpush2.msra.mxu0 0.0
    %864 = vmatprep.subr.mxu0 0.0
    %865 = vmatpush2.msra.mxu0 0.0
    %866 = vmatprep.subr.mxu0 0.0
    %867 = vmatpush2.msra.mxu0 0.0
    %868 = vmatprep.subr.mxu0 0.0
    %869 = vmatpush2.msra.mxu0 0.0
    %870 = vmatprep.subr.mxu0 0.0
    %871 = vmatpush2.msra.mxu0 0.0
    %872 = vmatprep.subr.mxu0 0.0
    %873 = vmatpush2.msra.mxu0 0.0
    %874 = vmatprep.subr.mxu0 0.0
    %875 = vmatpush2.msra.mxu0 0.0
    %876 = vmatprep.subr.mxu0 0.0
    %877 = vmatpush2.msra.mxu0 0.0
    %878 = vmatprep.subr.mxu0 0.0
    %879 = vmatpush2.msra.mxu0 0.0
    %880 = vmatprep.subr.mxu0 0.0
    %881 = vmatpush2.msra.mxu0 0.0
    %882 = vmatprep.mubr.f32.mxu0 0.0
    %883 = vmatmul.mubr.f32.gmra.mxu0 %v816
    %v884 = vpop.f32.mrf.mxu0
    %v885 = vadd.f32 0.0, %v884
    %v886 = vpop.f32.mrf.mxu0
    %887 = vdwg.mxu0
    %v888 = vadd.f32 %v815, %v885
    %v889 = vxor.u32 %v888, 2147483648
    %v890 = vmul.f32 %v889, 1.442695
    %v891 = vpow.pop %v890
    %v892 = vadd.f32 %v891, 1.0
    %v893 = vrcp.pop %v892
    %v894 = vmul.f32 1.0, %v893
    %v895 = vadd.f32 %v885, %v356
    %897 = vrot.lane.b32.xlu0 %v895, 108
    %v898 = vpop.permute.xlu0 %897
    %v900 = vmul.f32 %v894, %v898
    %902 = vrot.lane.b32.xlu0 %v900, 20
    %v903 = vpop.permute.xlu0 %902
    %v905 = vadd.f32 %v815, %v903
    %v906 = vtanh.pop %v905
    %v907 = vsub.f32 1.0, %v894
    %909 = vrot.lane.b32.xlu0 %v906, 118
    %v910 = vpop.permute.xlu0 %909
    %v912 = vmul.f32 %v907, %v910
    %v913 = vmul.f32 %v894, %v807
    %v914 = vadd.f32 %v912, %v913
    %916 = vrot.lane.b32.xlu0 %v914, 118
    %v917 = vpop.permute.xlu0 %916
    %s919 = scalar_lea.vmem [#allocation3], 10
    %920 = vst.msk [vmem:[%s919] sm:$0x3] %vm384, %v917
    %s921 = scalar_lea.vmem [#allocation2], 12
    %v922 = vld [vmem:[%s921] sm:$0x3]
    %v923 = vsel %vm268, %v917, 0
    %925 = vmatprep.subr.mxu0 0.0
    %926 = vmatpush1.msra.mxu0 0.0
    %927 = vmatprep.subr.mxu0 0.0
    %928 = vmatpush1.msra.mxu0 0.0
    %929 = vmatprep.subr.mxu0 0.0
    %930 = vmatpush1.msra.mxu0 0.0
    %931 = vmatprep.subr.mxu0 0.0
    %932 = vmatpush1.msra.mxu0 0.0
    %933 = vmatprep.subr.mxu0 0.0
    %934 = vmatpush1.msra.mxu0 0.0
    %935 = vmatprep.subr.mxu0 0.0
    %936 = vmatpush1.msra.mxu0 0.0
    %937 = vmatprep.subr.mxu0 0.0
    %938 = vmatpush1.msra.mxu0 0.0
    %939 = vmatprep.subr.mxu0 0.0
    %940 = vmatpush1.msra.mxu0 0.0
    %941 = vmatprep.subr.mxu0 0.0
    %942 = vmatpush1.msra.mxu0 0.0
    %943 = vmatprep.subr.mxu0 0.0
    %944 = vmatpush1.msra.mxu0 0.0
    %945 = vmatprep.subr.mxu0 0.0
    %946 = vmatpush1.msra.mxu0 0.0
    %947 = vmatprep.subr.mxu0 0.0
    %948 = vmatpush1.msra.mxu0 0.0
    %949 = vmatprep.subr.mxu0 0.0
    %950 = vmatpush1.msra.mxu0 0.0
    %951 = vmatprep.subr.mxu0 0.0
    %952 = vmatpush1.msra.mxu0 0.0
    %953 = vmatprep.subr.mxu0 0.0
    %954 = vmatpush1.msra.mxu0 %v274
    %955 = vmatprep.subr.mxu0 0.0
    %956 = vmatpush1.msra.mxu0 %v75
    %957 = vmatprep.subr.mxu0 0.0
    %958 = vmatpush2.msra.mxu0 0.0
    %959 = vmatprep.subr.mxu0 0.0
    %960 = vmatpush2.msra.mxu0 0.0
    %961 = vmatprep.subr.mxu0 0.0
    %962 = vmatpush2.msra.mxu0 0.0
    %963 = vmatprep.subr.mxu0 0.0
    %964 = vmatpush2.msra.mxu0 0.0
    %965 = vmatprep.subr.mxu0 0.0
    %966 = vmatpush2.msra.mxu0 0.0
    %967 = vmatprep.subr.mxu0 0.0
    %968 = vmatpush2.msra.mxu0 0.0
    %969 = vmatprep.subr.mxu0 0.0
    %970 = vmatpush2.msra.mxu0 0.0
    %971 = vmatprep.subr.mxu0 0.0
    %972 = vmatpush2.msra.mxu0 0.0
    %973 = vmatprep.subr.mxu0 0.0
    %974 = vmatpush2.msra.mxu0 0.0
    %975 = vmatprep.subr.mxu0 0.0
    %976 = vmatpush2.msra.mxu0 0.0
    %977 = vmatprep.subr.mxu0 0.0
    %978 = vmatpush2.msra.mxu0 0.0
    %979 = vmatprep.subr.mxu0 0.0
    %980 = vmatpush2.msra.mxu0 0.0
    %981 = vmatprep.subr.mxu0 0.0
    %982 = vmatpush2.msra.mxu0 0.0
    %983 = vmatprep.subr.mxu0 0.0
    %984 = vmatpush2.msra.mxu0 0.0
    %985 = vmatprep.subr.mxu0 0.0
    %986 = vmatpush2.msra.mxu0 0.0
    %987 = vmatprep.subr.mxu0 0.0
    %988 = vmatpush2.msra.mxu0 0.0
    %989 = vmatprep.mubr.f32.mxu0 0.0
    %990 = vmatmul.mubr.f32.gmra.mxu0 %v923
    %v991 = vpop.f32.mrf.mxu0
    %v992 = vadd.f32 0.0, %v991
    %v993 = vpop.f32.mrf.mxu0
    %994 = vdwg.mxu0
    %v995 = vadd.f32 %v922, %v992
    %v996 = vxor.u32 %v995, 2147483648
    %v997 = vmul.f32 %v996, 1.442695
    %v998 = vpow.pop %v997
    %v999 = vadd.f32 %v998, 1.0
    %v1000 = vrcp.pop %v999
    %v1001 = vmul.f32 1.0, %v1000
    %v1002 = vadd.f32 %v992, %v356
    %1004 = vrot.lane.b32.xlu0 %v1002, 108
    %v1005 = vpop.permute.xlu0 %1004
    %v1007 = vmul.f32 %v1001, %v1005
    %1009 = vrot.lane.b32.xlu0 %v1007, 20
    %v1010 = vpop.permute.xlu0 %1009
    %v1012 = vadd.f32 %v922, %v1010
    %v1013 = vtanh.pop %v1012
    %v1014 = vsub.f32 1.0, %v1001
    %1016 = vrot.lane.b32.xlu0 %v1013, 118
    %v1017 = vpop.permute.xlu0 %1016
    %v1019 = vmul.f32 %v1014, %v1017
    %v1020 = vmul.f32 %v1001, %v914
    %v1021 = vadd.f32 %v1019, %v1020
    %1023 = vrot.lane.b32.xlu0 %v1021, 118
    %v1024 = vpop.permute.xlu0 %1023
    %s1026 = scalar_lea.vmem [#allocation3], 12
    %1027 = vst.msk [vmem:[%s1026] sm:$0x3] %vm384, %v1024
    %s1028 = scalar_lea.vmem [#allocation2], 14
    %v1029 = vld [vmem:[%s1028] sm:$0x3]
    %v1030 = vsel %vm268, %v1024, 0
    %1032 = vmatprep.subr.mxu0 0.0
    %1033 = vmatpush1.msra.mxu0 0.0
    %1034 = vmatprep.subr.mxu0 0.0
    %1035 = vmatpush1.msra.mxu0 0.0
    %1036 = vmatprep.subr.mxu0 0.0
    %1037 = vmatpush1.msra.mxu0 0.0
    %1038 = vmatprep.subr.mxu0 0.0
    %1039 = vmatpush1.msra.mxu0 0.0
    %1040 = vmatprep.subr.mxu0 0.0
    %1041 = vmatpush1.msra.mxu0 0.0
    %1042 = vmatprep.subr.mxu0 0.0
    %1043 = vmatpush1.msra.mxu0 0.0
    %1044 = vmatprep.subr.mxu0 0.0
    %1045 = vmatpush1.msra.mxu0 0.0
    %1046 = vmatprep.subr.mxu0 0.0
    %1047 = vmatpush1.msra.mxu0 0.0
    %1048 = vmatprep.subr.mxu0 0.0
    %1049 = vmatpush1.msra.mxu0 0.0
    %1050 = vmatprep.subr.mxu0 0.0
    %1051 = vmatpush1.msra.mxu0 0.0
    %1052 = vmatprep.subr.mxu0 0.0
    %1053 = vmatpush1.msra.mxu0 0.0
    %1054 = vmatprep.subr.mxu0 0.0
    %1055 = vmatpush1.msra.mxu0 0.0
    %1056 = vmatprep.subr.mxu0 0.0
    %1057 = vmatpush1.msra.mxu0 0.0
    %1058 = vmatprep.subr.mxu0 0.0
    %1059 = vmatpush1.msra.mxu0 0.0
    %1060 = vmatprep.subr.mxu0 0.0
    %1061 = vmatpush1.msra.mxu0 %v274
    %1062 = vmatprep.subr.mxu0 0.0
    %1063 = vmatpush1.msra.mxu0 %v75
    %1064 = vmatprep.subr.mxu0 0.0
    %1065 = vmatpush2.msra.mxu0 0.0
    %1066 = vmatprep.subr.mxu0 0.0
    %1067 = vmatpush2.msra.mxu0 0.0
    %1068 = vmatprep.subr.mxu0 0.0
    %1069 = vmatpush2.msra.mxu0 0.0
    %1070 = vmatprep.subr.mxu0 0.0
    %1071 = vmatpush2.msra.mxu0 0.0
    %1072 = vmatprep.subr.mxu0 0.0
    %1073 = vmatpush2.msra.mxu0 0.0
    %1074 = vmatprep.subr.mxu0 0.0
    %1075 = vmatpush2.msra.mxu0 0.0
    %1076 = vmatprep.subr.mxu0 0.0
    %1077 = vmatpush2.msra.mxu0 0.0
    %1078 = vmatprep.subr.mxu0 0.0
    %1079 = vmatpush2.msra.mxu0 0.0
    %1080 = vmatprep.subr.mxu0 0.0
    %1081 = vmatpush2.msra.mxu0 0.0
    %1082 = vmatprep.subr.mxu0 0.0
    %1083 = vmatpush2.msra.mxu0 0.0
    %1084 = vmatprep.subr.mxu0 0.0
    %1085 = vmatpush2.msra.mxu0 0.0
    %1086 = vmatprep.subr.mxu0 0.0
    %1087 = vmatpush2.msra.mxu0 0.0
    %1088 = vmatprep.subr.mxu0 0.0
    %1089 = vmatpush2.msra.mxu0 0.0
    %1090 = vmatprep.subr.mxu0 0.0
    %1091 = vmatpush2.msra.mxu0 0.0
    %1092 = vmatprep.subr.mxu0 0.0
    %1093 = vmatpush2.msra.mxu0 0.0
    %1094 = vmatprep.subr.mxu0 0.0
    %1095 = vmatpush2.msra.mxu0 0.0
    %1096 = vmatprep.mubr.f32.mxu0 0.0
    %1097 = vmatmul.mubr.f32.gmra.mxu0 %v1030
    %v1098 = vpop.f32.mrf.mxu0
    %v1099 = vadd.f32 0.0, %v1098
    %v1100 = vpop.f32.mrf.mxu0
    %1101 = vdwg.mxu0
    %v1102 = vadd.f32 %v1029, %v1099
    %v1103 = vxor.u32 %v1102, 2147483648
    %v1104 = vmul.f32 %v1103, 1.442695
    %v1105 = vpow.pop %v1104
    %v1106 = vadd.f32 %v1105, 1.0
    %v1107 = vrcp.pop %v1106
    %v1108 = vmul.f32 1.0, %v1107
    %v1109 = vadd.f32 %v1099, %v356
    %1111 = vrot.lane.b32.xlu0 %v1109, 108
    %v1112 = vpop.permute.xlu0 %1111
    %v1114 = vmul.f32 %v1108, %v1112
    %1116 = vrot.lane.b32.xlu0 %v1114, 20
    %v1117 = vpop.permute.xlu0 %1116
    %v1119 = vadd.f32 %v1029, %v1117
    %v1120 = vtanh.pop %v1119
    %v1121 = vsub.f32 1.0, %v1108
    %1123 = vrot.lane.b32.xlu0 %v1120, 118
    %v1124 = vpop.permute.xlu0 %1123
    %v1126 = vmul.f32 %v1121, %v1124
    %v1127 = vmul.f32 %v1108, %v1021
    %v1128 = vadd.f32 %v1126, %v1127
    %1130 = vrot.lane.b32.xlu0 %v1128, 118
    %v1131 = vpop.permute.xlu0 %1130
    %s1133 = scalar_lea.vmem [#allocation3], 14
    %1134 = vst.msk [vmem:[%s1133] sm:$0x3] %vm384, %v1131
    %v1135 = vld [vmem:[#allocation10] sm:$0xff]
    %v1136 = vld [vmem:[#allocation10 + $0x8] sm:$0x3]
    %v1137 = vld [vmem:[#allocation10 + $0xa] sm:$0x1]
    %v1138 = vld [vmem:[#allocation10 + $0xb] sm:$0x1]
    %v1139 = vld [vmem:[#allocation10 + $0xc] sm:$0x1]
    %v1140 = vld [vmem:[#allocation3] sm:$0x3]
    %v1141 = vld [vmem:[#allocation3 + $0x2] sm:$0x3]
    %v1142 = vld [vmem:[#allocation3 + $0x4] sm:$0x3]
    %v1143 = vld [vmem:[#allocation3 + $0x6] sm:$0x3]
    %v1144 = vld [vmem:[#allocation3 + $0x8] sm:$0x3]
    %v1145 = vld [vmem:[#allocation3 + $0xa] sm:$0x3]
    %v1146 = vld [vmem:[#allocation3 + $0xc] sm:$0x3]
    %v1147 = vld [vmem:[#allocation3 + $0xe] sm:$0x3]
    %v1148 = vlaneseq
    %v1149 = vshrl.u32 %v1148, 7
    %v1150 = vsub.s32 0, %v1149
    %v1151 = vrot.slane %v1137, %v1150
    %v1160 = vcombine.low %v1140, %v1141
    %v1161 = vcombine.low %v1142, %v1143
    %v1163 = vunpack.c.l.s4 1983009808
    %v1164 = vunpack.c.0.s8 %v1163
    %v1165 = vlaneseq
    %v1166 = vshrl.u32 %v1165, 7
    %v1167 = vsub.s32 %v1164, %v1166
    %v1168 = vrot.slane %v1160, %v1167
    %v1170 = vunpack.c.l.s4 1983009808
    %v1171 = vunpack.c.0.s8 %v1170
    %v1172 = vlaneseq
    %v1173 = vshrl.u32 %v1172, 7
    %v1174 = vsub.s32 %v1171, %v1173
    %v1175 = vrot.slane %v1161, %v1174
    %v1176 = vcombine.low %v1168, %v1175
    %v1177 = vcombine.low %v1144, %v1145
    %v1178 = vcombine.low %v1146, %v1147
    %v1180 = vunpack.c.l.s4 1983009808
    %v1181 = vunpack.c.0.s8 %v1180
    %v1182 = vlaneseq
    %v1183 = vshrl.u32 %v1182, 7
    %v1184 = vsub.s32 %v1181, %v1183
    %v1185 = vrot.slane %v1177, %v1184
    %v1187 = vunpack.c.l.s4 1983009808
    %v1188 = vunpack.c.0.s8 %v1187
    %v1189 = vlaneseq
    %v1190 = vshrl.u32 %v1189, 7
    %v1191 = vsub.s32 %v1188, %v1190
    %v1192 = vrot.slane %v1178, %v1191
    %v1193 = vcombine.low %v1185, %v1192
    %v1194 = vsel %vm268, %v1176, 0
    %v1196 = vsel %vm268, %v1193, 0
    %v1199 = vsel %vm272, %v1136, 0
    %1201 = vmatprep.subr.mxu0 0.0
    %1202 = vmatpush1.msra.mxu0 0.0
    %1203 = vmatprep.subr.mxu0 0.0
    %1204 = vmatpush1.msra.mxu0 0.0
    %1205 = vmatprep.subr.mxu0 0.0
    %1206 = vmatpush1.msra.mxu0 0.0
    %1207 = vmatprep.subr.mxu0 0.0
    %1208 = vmatpush1.msra.mxu0 0.0
    %1209 = vmatprep.subr.mxu0 0.0
    %1210 = vmatpush1.msra.mxu0 0.0
    %1211 = vmatprep.subr.mxu0 0.0
    %1212 = vmatpush1.msra.mxu0 0.0
    %1213 = vmatprep.subr.mxu0 0.0
    %1214 = vmatpush1.msra.mxu0 0.0
    %1215 = vmatprep.subr.mxu0 0.0
    %1216 = vmatpush1.msra.mxu0 0.0
    %1217 = vmatprep.subr.mxu0 0.0
    %1218 = vmatpush1.msra.mxu0 0.0
    %1219 = vmatprep.subr.mxu0 0.0
    %1220 = vmatpush1.msra.mxu0 0.0
    %1221 = vmatprep.subr.mxu0 0.0
    %1222 = vmatpush1.msra.mxu0 0.0
    %1223 = vmatprep.subr.mxu0 0.0
    %1224 = vmatpush1.msra.mxu0 0.0
    %1225 = vmatprep.subr.mxu0 0.0
    %1226 = vmatpush1.msra.mxu0 0.0
    %1227 = vmatprep.subr.mxu0 0.0
    %1228 = vmatpush1.msra.mxu0 0.0
    %1229 = vmatprep.subr.mxu0 0.0
    %1230 = vmatpush1.msra.mxu0 %v1199
    %1231 = vmatprep.subr.mxu0 0.0
    %1232 = vmatpush1.msra.mxu0 %v1135
    %1233 = vmatprep.subr.mxu0 0.0
    %1234 = vmatpush2.msra.mxu0 0.0
    %1235 = vmatprep.subr.mxu0 0.0
    %1236 = vmatpush2.msra.mxu0 0.0
    %1237 = vmatprep.subr.mxu0 0.0
    %1238 = vmatpush2.msra.mxu0 0.0
    %1239 = vmatprep.subr.mxu0 0.0
    %1240 = vmatpush2.msra.mxu0 0.0
    %1241 = vmatprep.subr.mxu0 0.0
    %1242 = vmatpush2.msra.mxu0 0.0
    %1243 = vmatprep.subr.mxu0 0.0
    %1244 = vmatpush2.msra.mxu0 0.0
    %1245 = vmatprep.subr.mxu0 0.0
    %1246 = vmatpush2.msra.mxu0 0.0
    %1247 = vmatprep.subr.mxu0 0.0
    %1248 = vmatpush2.msra.mxu0 0.0
    %1249 = vmatprep.subr.mxu0 0.0
    %1250 = vmatpush2.msra.mxu0 0.0
    %1251 = vmatprep.subr.mxu0 0.0
    %1252 = vmatpush2.msra.mxu0 0.0
    %1253 = vmatprep.subr.mxu0 0.0
    %1254 = vmatpush2.msra.mxu0 0.0
    %1255 = vmatprep.subr.mxu0 0.0
    %1256 = vmatpush2.msra.mxu0 0.0
    %1257 = vmatprep.subr.mxu0 0.0
    %1258 = vmatpush2.msra.mxu0 0.0
    %1259 = vmatprep.subr.mxu0 0.0
    %1260 = vmatpush2.msra.mxu0 0.0
    %1261 = vmatprep.subr.mxu0 0.0
    %1262 = vmatpush2.msra.mxu0 0.0
    %1263 = vmatprep.subr.mxu0 0.0
    %1264 = vmatpush2.msra.mxu0 0.0
    %1265 = vmatprep.mubr.f32.mxu0 0.0
    %1266 = vmatmul.mubr.f32.gmra.mxu0 %v1194
    %v1267 = vpop.f32.mrf.mxu0
    %v1268 = vadd.f32 %v1151, %v1267
    %v1269 = vpop.f32.mrf.mxu0
    %1270 = vmatprep.mubr.f32.mxu0 0.0
    %1271 = vmatmul.mubr.f32.gmra.mxu0 %v1196
    %v1272 = vpop.f32.mrf.mxu0
    %v1273 = vadd.f32 %v1151, %v1272
    %v1274 = vpop.f32.mrf.mxu0
    %1275 = vdwg.mxu0
    %v1276 = vmax.f32 %v1268, 0.0
    %v1277 = vmax.f32 %v1273, 0.0
    %v1278 = vlaneseq
    %v1279 = vshrl.u32 %v1278, 7
    %v1280 = vsub.s32 0, %v1279
    %v1281 = vrot.slane %v1138, %v1280
    %v1282 = vmul.f32 %v1276, %v1281
    %v1283 = vmul.f32 %v1277, %v1281
    %v1284 = vsel %vm268, %v1282, 0.0
    %1285 = vadd.xlane.f32.xlu0 %v1284
    %v1286 = vpop.xlane.xlu0 %1285
    %v1287 = vsel %vm268, %v1283, 0.0
    %1288 = vadd.xlane.f32.xlu0 %v1287
    %v1289 = vpop.xlane.xlu0 %1288
    %v1290 = vlaneseq
    %v1291 = vshrl.u32 %v1290, 7
    %v1292 = vsub.s32 0, %v1291
    %v1293 = vrot.slane %v1139, %v1292
    %v1294 = vadd.f32 %v1286, %v1293
    %v1295 = vadd.f32 %v1289, %v1293
    %vm1296 = vcmask 7168
    %1297 = vst.msk [vmem:[%s4] sm:$0xff] %vm1296, %v1294
    %1298 = vst.msk [vmem:[%s4 + $0x8] sm:$0xff] %vm1296, %v1295
    %1299 = vst.msk [vmem:[#allocation12] sm:$0x3] %vm384, %v1131
    // Predicated region
    $region34: #{tpu_custom_call.1} parent=1 // pred_check
      _
    $region35: #{tpu_custom_call.1} parent=1 // pred_check_branch
      %1301 = sbr.rel (0) target = $region37
    $region36: #{tpu_custom_call.1} parent=1 // pred_region
      _
    $region37: #{tpu_custom_call.1} parent=1 // pred_fallthru
      _
    // Predicated region
    $region38: #{tpu_custom_call.1} parent=1 // pred_check
      _
    $region39: #{tpu_custom_call.1} parent=1 // pred_check_branch
      %1303 = sbr.rel (0) target = $region41
    $region40: #{tpu_custom_call.1} parent=1 // pred_region
      %s1305 = ssub.s32 32, 32
      %1306 = vsyncadd [#allocation6], %s1305
      %s1308 = sshll.u32 [#allocation12], 4
      %s1309 = int_to_ptr.vmem [resolvable:$true] %s1308
      %1311 = dma.vmem_to_hbm [thread:$0]  %s1309, 32, %s5, [#allocation6]
    $region41: #{tpu_custom_call.1} parent=1 // pred_fallthru
      _
    // Predicated region
    $region42: #{tpu_custom_call.1} parent=1 // pred_check
      _
    $region43: #{tpu_custom_call.1} parent=1 // pred_check_branch
      %1313 = sbr.rel (0) target = $region45
    $region44: #{tpu_custom_call.1} parent=1 // pred_region
      _
    $region45: #{tpu_custom_call.1} parent=1 // pred_fallthru
      _
    // Predicated region
    $region46: #{tpu_custom_call.1} parent=1 // pred_check
      _
    $region47: #{tpu_custom_call.1} parent=1 // pred_check_branch
      %1315 = sbr.rel (0) target = $region49
    $region48: #{tpu_custom_call.1} parent=1 // pred_region
      %1316 = dma.done [#allocation6], 32
    $region49: #{tpu_custom_call.1} parent=1 // pred_fallthru
      _
    %1317 = vsyncpa [#allocation5], 1
    %1318 = vsyncpa [#allocation8], 1
    %1319 = vsyncpa [#allocation11], 1
    %1320 = vsyncpa [#allocation6], 1

</llo_original>
